<compile_context>
chip_gen: v6e
topology: v6e:2x2x1
jax: 0.10.0
libtpu: 0.0.40
codegen_flags: <defaults>
</compile_context>

<pallas_src>
import functools

import jax
import jax.numpy as jnp
from jax import lax
from jax.experimental import pallas as pl
from jax.experimental.pallas import tpu as pltpu


# --------------------------- Pallas recurrence kernel -------------------------
def _bigru_kernel(gi_f_ref, gi_b_ref, wh_f_ref, wh_b_ref, bhn_f_ref, bhn_b_ref,
                  out_f_ref, out_b_ref, hf_scr, hb_scr, *, hidden_dim, tb):
    """One time-block grid step of the fused fwd+bwd GRU recurrence.

    gi_f_ref : (1, TB, B, 3H)  fwd input gates for time block bt (biases folded)
    gi_b_ref : (1, TB, B, 3H)  bwd input gates for time block nblk-1-bt
    wh_*_ref : (H, 3H)         fused hidden->gates weights [r|z|n] (resident)
    bhn_*_ref: (1, H)          hidden bias of the n gate (r*(gh_n+bh_n))
    out_f_ref: (TB, B, H)      fwd hidden states, time block bt
    out_b_ref: (TB, B, H)      bwd hidden states, time block nblk-1-bt,
                               written in ORIGINAL time order
    h*_scr   : (B, H)          carried hidden state (VMEM resident across blocks)
    """
    H = hidden_dim
    bt = pl.program_id(0)

    @pl.when(bt == 0)
    def _():
        hf_scr[...] = jnp.zeros_like(hf_scr)
        hb_scr[...] = jnp.zeros_like(hb_scr)

    B = hf_scr.shape[0]
    f32 = jnp.float32
    wh_f = wh_f_ref[...]                                   # (H, 3H)
    wh_b = wh_b_ref[...]
    mxu_dt = wh_f.dtype
    # Hoisted broadcasts (JAX does not CSE broadcast_in_dim inside loops).
    bhn_f = jnp.broadcast_to(bhn_f_ref[...].astype(f32), (B, H))
    bhn_b = jnp.broadcast_to(bhn_b_ref[...].astype(f32), (B, H))

    def sigmoid(x):
        # One EUP op (tanh) instead of exp + reciprocal on the serial path.
        return 0.5 * (jnp.tanh(0.5 * x) + 1.0)

    def gru_cell(gi, gh, h, bhn):
        s = gi + gh                                        # single wide add
        r = sigmoid(s[:, :H])
        z = sigmoid(s[:, H:2 * H])
        n = jnp.tanh(gi[:, 2 * H:] + r * (gh[:, 2 * H:] + bhn))
        return (1.0 - z) * n + z * h

    def body(i, carry):
        h_f, h_b = carry
        j = tb - 1 - i                                     # bwd step index
        gi_f = gi_f_ref[0, i].astype(f32)                  # (B, 3H) contiguous slab
        gi_b = gi_b_ref[0, j].astype(f32)
        # Two independent dots -> pipeline back-to-back through the MXU.
        gh_f = jnp.dot(h_f.astype(mxu_dt), wh_f, preferred_element_type=f32)
        gh_b = jnp.dot(h_b.astype(mxu_dt), wh_b, preferred_element_type=f32)
        h_f = gru_cell(gi_f, gh_f, h_f, bhn_f)
        h_b = gru_cell(gi_b, gh_b, h_b, bhn_b)
        out_f_ref[i] = h_f                                 # contiguous (B, H) store
        out_b_ref[j] = h_b                                 # original time order
        return h_f, h_b

    h_f, h_b = lax.fori_loop(0, tb, body, (hf_scr[...], hb_scr[...]),
                             unroll=min(tb, 8))
    hf_scr[...] = h_f
    hb_scr[...] = h_b


def _choose_tb(T, B, H, itemsize, vmem_budget_bytes=6 * 1024 * 1024):
    """Timestep-block size derived from a VMEM budget (double-buffered streams)."""
    # Bytes held per timestep row: gi_f + gi_b (3H each) + out_f + out_b (H each),
    # times 2 for double buffering.
    bytes_per_step = 2 * B * (3 * H + 3 * H + H + H) * itemsize
    cap = max(1, vmem_budget_bytes // max(1, bytes_per_step))
    cap = min(cap, T, 256)
    best = 1
    for tb in range(cap, 0, -1):
        if T % tb == 0:
            if tb % 8 == 0:
                return tb
            best = max(best, tb)
    # TODO(synk): pad/mask awkward sequence lengths instead of small blocks.
    return best


def bigru_recurrence_pallas(gi_stack, wh_f, wh_b, bhn_f, bhn_b, hidden_dim):
    """gi_stack: (2, T, B, 3H) [fwd, bwd] input gates, time-major, unreversed.

    Returns (out_f, out_b), each (T, B, H) float32, both in original time order.
    """
    _, T, B, G = gi_stack.shape
    H = hidden_dim
    TB = _choose_tb(T, B, H, jnp.dtype(gi_stack.dtype).itemsize)
    assert T % TB == 0
    nblk = T // TB

    kernel = functools.partial(_bigru_kernel, hidden_dim=H, tb=TB)

    grid_spec = pltpu.PrefetchScalarGridSpec(
        num_scalar_prefetch=0,
        grid=(nblk,),                               # sequential time blocks
        in_specs=[
            # Forward view of gi (time blocks visited forward).
            pl.BlockSpec((1, TB, B, G), lambda bt: (0, bt, 0, 0)),
            # Backward view of gi (time blocks visited in reverse) — same HBM
            # array, no reversed copy materialized.
            pl.BlockSpec((1, TB, B, G), lambda bt: (1, nblk - 1 - bt, 0, 0)),
            pl.BlockSpec((H, G), lambda bt: (0, 0)),     # wh_f (resident, no re-DMA)
            pl.BlockSpec((H, G), lambda bt: (0, 0)),     # wh_b
            pl.BlockSpec((1, H), lambda bt: (0, 0)),     # bh_n fwd
            pl.BlockSpec((1, H), lambda bt: (0, 0)),     # bh_n bwd
        ],
        out_specs=[
            pl.BlockSpec((TB, B, H), lambda bt: (bt, 0, 0)),             # out_f
            pl.BlockSpec((TB, B, H), lambda bt: (nblk - 1 - bt, 0, 0)),  # out_b
        ],
        scratch_shapes=[pltpu.VMEM((B, H), jnp.float32),
                        pltpu.VMEM((B, H), jnp.float32)],
    )

    return pl.pallas_call(
        kernel,
        out_shape=(jax.ShapeDtypeStruct((T, B, H), jnp.float32),
                   jax.ShapeDtypeStruct((T, B, H), jnp.float32)),
        grid_spec=grid_spec,
        compiler_params=pltpu.CompilerParams(
            # Single grid axis is the sequential recurrence over time blocks.
            # VMEM use is bounded by _choose_tb's 6 MiB budget, safely under the
            # scoped defaults on v5e (16 MiB) / v6e / v7x (32 MiB).
            dimension_semantics=("arbitrary",)),
    )(gi_stack, gi_stack, wh_f, wh_b, bhn_f, bhn_b)


# ------------------------------- full forward ---------------------------------
def encoder_forward(seq_tokens, emb_table, params, *, mxu_dtype=jnp.float32):
    """PyTorch-equivalent forward.

    seq_tokens: (B, T) int32
    params (fused layouts, gate order [r, z, n]):
      wi_{f,b}: (E, 3H)   wh_{f,b}: (H, 3H)   bi_{f,b}, bh_{f,b}: (3H,)
    Returns (hidden_out (B, 2H), output (B, T, 2H)).

    Set mxu_dtype=jnp.bfloat16 on v6e/v7x for the native-MXU / half-traffic
    path (loosen tolerances accordingly); gate math and the h carry stay f32.
    """
    H = params["wh_f"].shape[0]
    B, T = seq_tokens.shape

    # Embedding lookup directly in time-major (T, B, E) layout so the input
    # projection feeds the kernel with no extra transpose pass.
    x = jnp.take(emb_table, seq_tokens.T, axis=0).astype(jnp.float32)   # (T, B, E)

    # ONE batched input projection for all timesteps / gates / directions,
    # with bi and bh_r/bh_z folded in (bh_n must stay inside r*(.)).
    wi_stack = jnp.stack([params["wi_f"], params["wi_b"]], axis=0)       # (2, E, 3H)
    zeros_h = jnp.zeros((H,), jnp.float32)
    b_f = params["bi_f"] + jnp.concatenate([params["bh_f"][:2 * H], zeros_h])
    b_b = params["bi_b"] + jnp.concatenate([params["bh_b"][:2 * H], zeros_h])
    b_stack = jnp.stack([b_f, b_b], axis=0)[:, None, None, :]            # (2,1,1,3H)
    gi_stack = jnp.einsum("tbe,dek->dtbk", x, wi_stack) + b_stack        # (2, T, B, 3H)
    gi_stack = gi_stack.astype(mxu_dtype)

    wh_f = params["wh_f"].astype(mxu_dtype)
    wh_b = params["wh_b"].astype(mxu_dtype)
    bhn_f = params["bh_f"][2 * H:][None, :]                              # (1, H)
    bhn_b = params["bh_b"][2 * H:][None, :]

    out_f, out_b = bigru_recurrence_pallas(gi_stack, wh_f, wh_b, bhn_f, bhn_b, H)

    # Both outputs are already in original time order (no reversal pass).
    output = jnp.concatenate([out_f, out_b], axis=-1).transpose(1, 0, 2)   # (B, T, 2H)
    # Final hidden states: fwd after t=T-1, bwd after consuming t=0.
    hidden_out = jnp.concatenate([out_f[T - 1], out_b[0]], axis=-1)        # (B, 2H)
    return hidden_out, output


# ---------------------- pure-JAX reference (sanity check) ---------------------
def _ref_gru_dir(x_tbe, wi, wh, bi, bh, H):
    def step(h, x):
        gi = x @ wi + bi            # (B, 3H)
        gh = h @ wh                 # (B, 3H)
        r = jax.nn.sigmoid(gi[:, :H] + gh[:, :H] + bh[:H])
        z = jax.nn.sigmoid(gi[:, H:2 * H] + gh[:, H:2 * H] + bh[H:2 * H])
        n = jnp.tanh(gi[:, 2 * H:] + r * (gh[:, 2 * H:] + bh[2 * H:]))
        h_new = (1.0 - z) * n + z * h
        return h_new, h_new

    B = x_tbe.shape[1]
    h0 = jnp.zeros((B, H), jnp.float32)
    h_last, outs = jax.lax.scan(step, h0, x_tbe)
    return outs, h_last


def encoder_reference(seq_tokens, emb_table, params):
    H = params["wh_f"].shape[0]
    x = jnp.take(emb_table, seq_tokens, axis=0).astype(jnp.float32)
    x_tbe = jnp.transpose(x, (1, 0, 2))
    out_f, hf = _ref_gru_dir(x_tbe, params["wi_f"], params["wh_f"],
                             params["bi_f"], params["bh_f"], H)
    out_b_rev, hb = _ref_gru_dir(x_tbe[::-1], params["wi_b"], params["wh_b"],
                                 params["bi_b"], params["bh_b"], H)
    out_b = out_b_rev[::-1]
    output = jnp.concatenate(
        [jnp.transpose(out_f, (1, 0, 2)), jnp.transpose(out_b, (1, 0, 2))], axis=-1)
    hidden_out = jnp.concatenate([hf, hb], axis=-1)
    return hidden_out, output


# ------------------------------------ main -------------------------------------
if __name__ == "__main__":
    INPUT_DIM = 16   # vocab size
    EMB_DIM = 32
    HIDDEN_DIM = 32
    B, T = 2, 8

    key = jax.random.PRNGKey(0)
    ks = jax.random.split(key, 12)
    scale = 0.1
    H3 = 3 * HIDDEN_DIM

    emb_table = scale * jax.random.normal(ks[0], (INPUT_DIM, EMB_DIM), jnp.float32)

    # Fused GRU params, gate order [r, z, n] (PyTorch convention), stored as
    # (in, 3H) so the projection is x @ W directly.
    params = {
        "wi_f": scale * jax.random.normal(ks[1], (EMB_DIM, H3), jnp.float32),
        "wh_f": scale * jax.random.normal(ks[2], (HIDDEN_DIM, H3), jnp.float32),
        "bi_f": scale * jax.random.normal(ks[3], (H3,), jnp.float32),
        "bh_f": scale * jax.random.normal(ks[4], (H3,), jnp.float32),
        "wi_b": scale * jax.random.normal(ks[5], (EMB_DIM, H3), jnp.float32),
        "wh_b": scale * jax.random.normal(ks[6], (HIDDEN_DIM, H3), jnp.float32),
        "bi_b": scale * jax.random.normal(ks[7], (H3,), jnp.float32),
        "bh_b": scale * jax.random.normal(ks[8], (H3,), jnp.float32),
    }

    seq_tokens = jax.random.randint(ks[9], (B, T), 0, INPUT_DIM, jnp.int32)

    hidden_out, output = jax.jit(encoder_forward)(seq_tokens, emb_table, params)
    jax.block_until_ready((hidden_out, output))

    assert hidden_out.shape == (B, 2 * HIDDEN_DIM)
    assert output.shape == (B, T, 2 * HIDDEN_DIM)

    ref_hidden, ref_output = jax.jit(encoder_reference)(seq_tokens, emb_table, params)
    assert jnp.allclose(hidden_out, ref_hidden, atol=1e-3, rtol=1e-3)
    assert jnp.allclose(output, ref_output, atol=1e-3, rtol=1e-3)

    print("KERNEL_OK")
</pallas_src>

<mosaic_0001>
module attributes {stable_mosaic.version = 11 : i64} {
  func.func @_bigru_kernel(%arg0: i32, %arg1: memref<1x8x2x96xf32, #tpu.memory_space<vmem>>, %arg2: memref<1x8x2x96xf32, #tpu.memory_space<vmem>>, %arg3: memref<32x96xf32, #tpu.memory_space<vmem>>, %arg4: memref<32x96xf32, #tpu.memory_space<vmem>>, %arg5: memref<1x32xf32, #tpu.memory_space<vmem>>, %arg6: memref<1x32xf32, #tpu.memory_space<vmem>>, %arg7: memref<8x2x32xf32, #tpu.memory_space<vmem>>, %arg8: memref<8x2x32xf32, #tpu.memory_space<vmem>>, %arg9: memref<2x32xf32, #tpu.memory_space<vmem>>, %arg10: memref<2x32xf32, #tpu.memory_space<vmem>>) attributes {dimension_semantics = [#tpu.dimension_semantics<arbitrary>], iteration_bounds = array<i64: 1>, scalar_prefetch = 0 : i64, scratch_operands = 2 : i64, tpu.core_type = #tpu.core_type<tc>, window_params = [{transform_indices = @transform_0, window_bounds = array<i64: 1, 8, 2, 96>}, {transform_indices = @transform_1, window_bounds = array<i64: 1, 8, 2, 96>}, {pipeline_mode = #tpu.pipeline_mode<synchronous>, transform_indices = @transform_2, window_bounds = array<i64: 32, 96>}, {pipeline_mode = #tpu.pipeline_mode<synchronous>, transform_indices = @transform_3, window_bounds = array<i64: 32, 96>}, {pipeline_mode = #tpu.pipeline_mode<synchronous>, transform_indices = @transform_4, window_bounds = array<i64: 1, 32>}, {pipeline_mode = #tpu.pipeline_mode<synchronous>, transform_indices = @transform_5, window_bounds = array<i64: 1, 32>}, {transform_indices = @transform_6, window_bounds = array<i64: 8, 2, 32>}, {transform_indices = @transform_7, window_bounds = array<i64: 8, 2, 32>}]} {
    %c0_i32 = arith.constant 0 : i32
    %0 = arith.cmpi eq, %arg0, %c0_i32 : i32
    %1 = arith.extui %0 : i1 to i32
    %c0_i32_0 = arith.constant 0 : i32
    %2 = arith.cmpi ne, %1, %c0_i32_0 : i32
    scf.if %2 {
      %cst_232 = arith.constant 0.000000e+00 : f32
      %599 = vector.broadcast %cst_232 : f32 to vector<2x32xf32>
      %c0_233 = arith.constant 0 : index
      %c0_234 = arith.constant 0 : index
      %600 = vector.load %arg9[%c0_233, %c0_234] : memref<2x32xf32, #tpu.memory_space<vmem>>, vector<2x32xf32>
      tpu.vector_store %arg9[%c0_233, %c0_234], %599 {strides = array<i32>} : memref<2x32xf32, #tpu.memory_space<vmem>>, vector<2x32xf32>,
      %cst_235 = arith.constant 0.000000e+00 : f32
      %601 = vector.broadcast %cst_235 : f32 to vector<2x32xf32>
      %c0_236 = arith.constant 0 : index
      %c0_237 = arith.constant 0 : index
      %602 = vector.load %arg10[%c0_236, %c0_237] : memref<2x32xf32, #tpu.memory_space<vmem>>, vector<2x32xf32>
      tpu.vector_store %arg10[%c0_236, %c0_237], %601 {strides = array<i32>} : memref<2x32xf32, #tpu.memory_space<vmem>>, vector<2x32xf32>,
    } else {
    }
    %c0 = arith.constant 0 : index
    %c0_1 = arith.constant 0 : index
    %3 = vector.load %arg3[%c0, %c0_1] : memref<32x96xf32, #tpu.memory_space<vmem>>, vector<32x96xf32>
    %c0_2 = arith.constant 0 : index
    %c0_3 = arith.constant 0 : index
    %4 = vector.load %arg4[%c0_2, %c0_3] : memref<32x96xf32, #tpu.memory_space<vmem>>, vector<32x96xf32>
    %c0_4 = arith.constant 0 : index
    %c0_5 = arith.constant 0 : index
    %5 = vector.load %arg5[%c0_4, %c0_5] : memref<1x32xf32, #tpu.memory_space<vmem>>, vector<1x32xf32>
    %6 = vector.shape_cast %5 : vector<1x32xf32> to vector<1x32xf32>
    %7 = vector.broadcast %6 : vector<1x32xf32> to vector<2x32xf32>
    %c0_6 = arith.constant 0 : index
    %c0_7 = arith.constant 0 : index
    %8 = vector.load %arg6[%c0_6, %c0_7] : memref<1x32xf32, #tpu.memory_space<vmem>>, vector<1x32xf32>
    %9 = vector.shape_cast %8 : vector<1x32xf32> to vector<1x32xf32>
    %10 = vector.broadcast %9 : vector<1x32xf32> to vector<2x32xf32>
    %c0_8 = arith.constant 0 : index
    %c0_9 = arith.constant 0 : index
    %11 = vector.load %arg9[%c0_8, %c0_9] : memref<2x32xf32, #tpu.memory_space<vmem>>, vector<2x32xf32>
    %c0_10 = arith.constant 0 : index
    %c0_11 = arith.constant 0 : index
    %12 = vector.load %arg10[%c0_10, %c0_11] : memref<2x32xf32, #tpu.memory_space<vmem>>, vector<2x32xf32>
    %c0_i32_12 = arith.constant 0 : i32
    %c7_i32 = arith.constant 7 : i32
    %13 = arith.subi %c7_i32, %c0_i32_12 : i32
    %c0_13 = arith.constant 0 : index
    %14 = arith.index_cast %c0_i32_12 : i32 to index
    %c0_14 = arith.constant 0 : index
    %c0_15 = arith.constant 0 : index
    %15 = vector.load %arg1[%c0_13, %14, %c0_14, %c0_15] : memref<1x8x2x96xf32, #tpu.memory_space<vmem>>, vector<1x1x2x96xf32>
    %16 = vector.shape_cast %15 : vector<1x1x2x96xf32> to vector<2x96xf32>
    %c0_16 = arith.constant 0 : index
    %17 = arith.index_cast %13 : i32 to index
    %c0_17 = arith.constant 0 : index
    %c0_18 = arith.constant 0 : index
    %18 = vector.load %arg2[%c0_16, %17, %c0_17, %c0_18] : memref<1x8x2x96xf32, #tpu.memory_space<vmem>>, vector<1x1x2x96xf32>
    %19 = vector.shape_cast %18 : vector<1x1x2x96xf32> to vector<2x96xf32>
    %cst = arith.constant dense<0.000000e+00> : vector<2x96xf32>
    %20 = tpu.matmul %11, %3, %cst {dimension_numbers = #tpu.dot_dimension_numbers<[1], [0], [0], [1], [0, 0, 1, 1], [], []>} : vector<2x32xf32>, vector<32x96xf32>, vector<2x96xf32> -> vector<2x96xf32>
    %cst_19 = arith.constant dense<0.000000e+00> : vector<2x96xf32>
    %21 = tpu.matmul %12, %4, %cst_19 {dimension_numbers = #tpu.dot_dimension_numbers<[1], [0], [0], [1], [0, 0, 1, 1], [], []>} : vector<2x32xf32>, vector<32x96xf32>, vector<2x96xf32> -> vector<2x96xf32>
    %22 = arith.addf %16, %20 : vector<2x96xf32>
    %23 = vector.extract_strided_slice %22 {offsets = [0, 0], sizes = [2, 32], strides = [1, 1]} : vector<2x96xf32> to vector<2x32xf32>
    %cst_20 = arith.constant 5.000000e-01 : f32
    %24 = vector.broadcast %cst_20 : f32 to vector<2x32xf32>
    %25 = arith.mulf %24, %23 : vector<2x32xf32>
    %26 = math.tanh %25 : vector<2x32xf32>
    %cst_21 = arith.constant 1.000000e+00 : f32
    %27 = vector.broadcast %cst_21 : f32 to vector<2x32xf32>
    %28 = arith.addf %26, %27 : vector<2x32xf32>
    %cst_22 = arith.constant 5.000000e-01 : f32
    %29 = vector.broadcast %cst_22 : f32 to vector<2x32xf32>
    %30 = arith.mulf %29, %28 : vector<2x32xf32>
    %31 = vector.extract_strided_slice %22 {offsets = [0, 32], sizes = [2, 32], strides = [1, 1]} : vector<2x96xf32> to vector<2x32xf32>
    %cst_23 = arith.constant 5.000000e-01 : f32
    %32 = vector.broadcast %cst_23 : f32 to vector<2x32xf32>
    %33 = arith.mulf %32, %31 : vector<2x32xf32>
    %34 = math.tanh %33 : vector<2x32xf32>
    %cst_24 = arith.constant 1.000000e+00 : f32
    %35 = vector.broadcast %cst_24 : f32 to vector<2x32xf32>
    %36 = arith.addf %34, %35 : vector<2x32xf32>
    %cst_25 = arith.constant 5.000000e-01 : f32
    %37 = vector.broadcast %cst_25 : f32 to vector<2x32xf32>
    %38 = arith.mulf %37, %36 : vector<2x32xf32>
    %39 = vector.extract_strided_slice %16 {offsets = [0, 64], sizes = [2, 32], strides = [1, 1]} : vector<2x96xf32> to vector<2x32xf32>
    %40 = vector.extract_strided_slice %20 {offsets = [0, 64], sizes = [2, 32], strides = [1, 1]} : vector<2x96xf32> to vector<2x32xf32>
    %41 = arith.addf %40, %7 : vector<2x32xf32>
    %42 = arith.mulf %30, %41 : vector<2x32xf32>
    %43 = arith.addf %39, %42 : vector<2x32xf32>
    %44 = math.tanh %43 : vector<2x32xf32>
    %cst_26 = arith.constant 1.000000e+00 : f32
    %45 = vector.broadcast %cst_26 : f32 to vector<2x32xf32>
    %46 = arith.subf %45, %38 : vector<2x32xf32>
    %47 = arith.mulf %46, %44 : vector<2x32xf32>
    %48 = arith.mulf %38, %11 : vector<2x32xf32>
    %49 = arith.addf %47, %48 : vector<2x32xf32>
    %50 = arith.addf %19, %21 : vector<2x96xf32>
    %51 = vector.extract_strided_slice %50 {offsets = [0, 0], sizes = [2, 32], strides = [1, 1]} : vector<2x96xf32> to vector<2x32xf32>
    %cst_27 = arith.constant 5.000000e-01 : f32
    %52 = vector.broadcast %cst_27 : f32 to vector<2x32xf32>
    %53 = arith.mulf %52, %51 : vector<2x32xf32>
    %54 = math.tanh %53 : vector<2x32xf32>
    %cst_28 = arith.constant 1.000000e+00 : f32
    %55 = vector.broadcast %cst_28 : f32 to vector<2x32xf32>
    %56 = arith.addf %54, %55 : vector<2x32xf32>
    %cst_29 = arith.constant 5.000000e-01 : f32
    %57 = vector.broadcast %cst_29 : f32 to vector<2x32xf32>
    %58 = arith.mulf %57, %56 : vector<2x32xf32>
    %59 = vector.extract_strided_slice %50 {offsets = [0, 32], sizes = [2, 32], strides = [1, 1]} : vector<2x96xf32> to vector<2x32xf32>
    %cst_30 = arith.constant 5.000000e-01 : f32
    %60 = vector.broadcast %cst_30 : f32 to vector<2x32xf32>
    %61 = arith.mulf %60, %59 : vector<2x32xf32>
    %62 = math.tanh %61 : vector<2x32xf32>
    %cst_31 = arith.constant 1.000000e+00 : f32
    %63 = vector.broadcast %cst_31 : f32 to vector<2x32xf32>
    %64 = arith.addf %62, %63 : vector<2x32xf32>
    %cst_32 = arith.constant 5.000000e-01 : f32
    %65 = vector.broadcast %cst_32 : f32 to vector<2x32xf32>
    %66 = arith.mulf %65, %64 : vector<2x32xf32>
    %67 = vector.extract_strided_slice %19 {offsets = [0, 64], sizes = [2, 32], strides = [1, 1]} : vector<2x96xf32> to vector<2x32xf32>
    %68 = vector.extract_strided_slice %21 {offsets = [0, 64], sizes = [2, 32], strides = [1, 1]} : vector<2x96xf32> to vector<2x32xf32>
    %69 = arith.addf %68, %10 : vector<2x32xf32>
    %70 = arith.mulf %58, %69 : vector<2x32xf32>
    %71 = arith.addf %67, %70 : vector<2x32xf32>
    %72 = math.tanh %71 : vector<2x32xf32>
    %cst_33 = arith.constant 1.000000e+00 : f32
    %73 = vector.broadcast %cst_33 : f32 to vector<2x32xf32>
    %74 = arith.subf %73, %66 : vector<2x32xf32>
    %75 = arith.mulf %74, %72 : vector<2x32xf32>
    %76 = arith.mulf %66, %12 : vector<2x32xf32>
    %77 = arith.addf %75, %76 : vector<2x32xf32>
    %78 = arith.index_cast %c0_i32_12 : i32 to index
    %c0_34 = arith.constant 0 : index
    %c0_35 = arith.constant 0 : index
    %79 = vector.load %arg7[%78, %c0_34, %c0_35] : memref<8x2x32xf32, #tpu.memory_space<vmem>>, vector<1x2x32xf32>
    %80 = vector.shape_cast %79 : vector<1x2x32xf32> to vector<2x32xf32>
    %81 = vector.shape_cast %49 : vector<2x32xf32> to vector<1x2x32xf32>
    tpu.vector_store %arg7[%78, %c0_34, %c0_35], %81 {strides = array<i32>} : memref<8x2x32xf32, #tpu.memory_space<vmem>>, vector<1x2x32xf32>,
    %82 = arith.index_cast %13 : i32 to index
    %c0_36 = arith.constant 0 : index
    %c0_37 = arith.constant 0 : index
    %83 = vector.load %arg8[%82, %c0_36, %c0_37] : memref<8x2x32xf32, #tpu.memory_space<vmem>>, vector<1x2x32xf32>
    %84 = vector.shape_cast %83 : vector<1x2x32xf32> to vector<2x32xf32>
    %85 = vector.shape_cast %77 : vector<2x32xf32> to vector<1x2x32xf32>
    tpu.vector_store %arg8[%82, %c0_36, %c0_37], %85 {strides = array<i32>} : memref<8x2x32xf32, #tpu.memory_space<vmem>>, vector<1x2x32xf32>,
    %c1_i32 = arith.constant 1 : i32
    %c7_i32_38 = arith.constant 7 : i32
    %86 = arith.subi %c7_i32_38, %c1_i32 : i32
    %c0_39 = arith.constant 0 : index
    %87 = arith.index_cast %c1_i32 : i32 to index
    %c0_40 = arith.constant 0 : index
    %c0_41 = arith.constant 0 : index
    %88 = vector.load %arg1[%c0_39, %87, %c0_40, %c0_41] : memref<1x8x2x96xf32, #tpu.memory_space<vmem>>, vector<1x1x2x96xf32>
    %89 = vector.shape_cast %88 : vector<1x1x2x96xf32> to vector<2x96xf32>
    %c0_42 = arith.constant 0 : index
    %90 = arith.index_cast %86 : i32 to index
    %c0_43 = arith.constant 0 : index
    %c0_44 = arith.constant 0 : index
    %91 = vector.load %arg2[%c0_42, %90, %c0_43, %c0_44] : memref<1x8x2x96xf32, #tpu.memory_space<vmem>>, vector<1x1x2x96xf32>
    %92 = vector.shape_cast %91 : vector<1x1x2x96xf32> to vector<2x96xf32>
    %cst_45 = arith.constant dense<0.000000e+00> : vector<2x96xf32>
    %93 = tpu.matmul %49, %3, %cst_45 {dimension_numbers = #tpu.dot_dimension_numbers<[1], [0], [0], [1], [0, 0, 1, 1], [], []>} : vector<2x32xf32>, vector<32x96xf32>, vector<2x96xf32> -> vector<2x96xf32>
    %cst_46 = arith.constant dense<0.000000e+00> : vector<2x96xf32>
    %94 = tpu.matmul %77, %4, %cst_46 {dimension_numbers = #tpu.dot_dimension_numbers<[1], [0], [0], [1], [0, 0, 1, 1], [], []>} : vector<2x32xf32>, vector<32x96xf32>, vector<2x96xf32> -> vector<2x96xf32>
    %95 = arith.addf %89, %93 : vector<2x96xf32>
    %96 = vector.extract_strided_slice %95 {offsets = [0, 0], sizes = [2, 32], strides = [1, 1]} : vector<2x96xf32> to vector<2x32xf32>
    %cst_47 = arith.constant 5.000000e-01 : f32
    %97 = vector.broadcast %cst_47 : f32 to vector<2x32xf32>
    %98 = arith.mulf %97, %96 : vector<2x32xf32>
    %99 = math.tanh %98 : vector<2x32xf32>
    %cst_48 = arith.constant 1.000000e+00 : f32
    %100 = vector.broadcast %cst_48 : f32 to vector<2x32xf32>
    %101 = arith.addf %99, %100 : vector<2x32xf32>
    %cst_49 = arith.constant 5.000000e-01 : f32
    %102 = vector.broadcast %cst_49 : f32 to vector<2x32xf32>
    %103 = arith.mulf %102, %101 : vector<2x32xf32>
    %104 = vector.extract_strided_slice %95 {offsets = [0, 32], sizes = [2, 32], strides = [1, 1]} : vector<2x96xf32> to vector<2x32xf32>
    %cst_50 = arith.constant 5.000000e-01 : f32
    %105 = vector.broadcast %cst_50 : f32 to vector<2x32xf32>
    %106 = arith.mulf %105, %104 : vector<2x32xf32>
    %107 = math.tanh %106 : vector<2x32xf32>
    %cst_51 = arith.constant 1.000000e+00 : f32
    %108 = vector.broadcast %cst_51 : f32 to vector<2x32xf32>
    %109 = arith.addf %107, %108 : vector<2x32xf32>
    %cst_52 = arith.constant 5.000000e-01 : f32
    %110 = vector.broadcast %cst_52 : f32 to vector<2x32xf32>
    %111 = arith.mulf %110, %109 : vector<2x32xf32>
    %112 = vector.extract_strided_slice %89 {offsets = [0, 64], sizes = [2, 32], strides = [1, 1]} : vector<2x96xf32> to vector<2x32xf32>
    %113 = vector.extract_strided_slice %93 {offsets = [0, 64], sizes = [2, 32], strides = [1, 1]} : vector<2x96xf32> to vector<2x32xf32>
    %114 = arith.addf %113, %7 : vector<2x32xf32>
    %115 = arith.mulf %103, %114 : vector<2x32xf32>
    %116 = arith.addf %112, %115 : vector<2x32xf32>
    %117 = math.tanh %116 : vector<2x32xf32>
    %cst_53 = arith.constant 1.000000e+00 : f32
    %118 = vector.broadcast %cst_53 : f32 to vector<2x32xf32>
    %119 = arith.subf %118, %111 : vector<2x32xf32>
    %120 = arith.mulf %119, %117 : vector<2x32xf32>
    %121 = arith.mulf %111, %49 : vector<2x32xf32>
    %122 = arith.addf %120, %121 : vector<2x32xf32>
    %123 = arith.addf %92, %94 : vector<2x96xf32>
    %124 = vector.extract_strided_slice %123 {offsets = [0, 0], sizes = [2, 32], strides = [1, 1]} : vector<2x96xf32> to vector<2x32xf32>
    %cst_54 = arith.constant 5.000000e-01 : f32
    %125 = vector.broadcast %cst_54 : f32 to vector<2x32xf32>
    %126 = arith.mulf %125, %124 : vector<2x32xf32>
    %127 = math.tanh %126 : vector<2x32xf32>
    %cst_55 = arith.constant 1.000000e+00 : f32
    %128 = vector.broadcast %cst_55 : f32 to vector<2x32xf32>
    %129 = arith.addf %127, %128 : vector<2x32xf32>
    %cst_56 = arith.constant 5.000000e-01 : f32
    %130 = vector.broadcast %cst_56 : f32 to vector<2x32xf32>
    %131 = arith.mulf %130, %129 : vector<2x32xf32>
    %132 = vector.extract_strided_slice %123 {offsets = [0, 32], sizes = [2, 32], strides = [1, 1]} : vector<2x96xf32> to vector<2x32xf32>
    %cst_57 = arith.constant 5.000000e-01 : f32
    %133 = vector.broadcast %cst_57 : f32 to vector<2x32xf32>
    %134 = arith.mulf %133, %132 : vector<2x32xf32>
    %135 = math.tanh %134 : vector<2x32xf32>
    %cst_58 = arith.constant 1.000000e+00 : f32
    %136 = vector.broadcast %cst_58 : f32 to vector<2x32xf32>
    %137 = arith.addf %135, %136 : vector<2x32xf32>
    %cst_59 = arith.constant 5.000000e-01 : f32
    %138 = vector.broadcast %cst_59 : f32 to vector<2x32xf32>
    %139 = arith.mulf %138, %137 : vector<2x32xf32>
    %140 = vector.extract_strided_slice %92 {offsets = [0, 64], sizes = [2, 32], strides = [1, 1]} : vector<2x96xf32> to vector<2x32xf32>
    %141 = vector.extract_strided_slice %94 {offsets = [0, 64], sizes = [2, 32], strides = [1, 1]} : vector<2x96xf32> to vector<2x32xf32>
    %142 = arith.addf %141, %10 : vector<2x32xf32>
    %143 = arith.mulf %131, %142 : vector<2x32xf32>
    %144 = arith.addf %140, %143 : vector<2x32xf32>
    %145 = math.tanh %144 : vector<2x32xf32>
    %cst_60 = arith.constant 1.000000e+00 : f32
    %146 = vector.broadcast %cst_60 : f32 to vector<2x32xf32>
    %147 = arith.subf %146, %139 : vector<2x32xf32>
    %148 = arith.mulf %147, %145 : vector<2x32xf32>
    %149 = arith.mulf %139, %77 : vector<2x32xf32>
    %150 = arith.addf %148, %149 : vector<2x32xf32>
    %151 = arith.index_cast %c1_i32 : i32 to index
    %c0_61 = arith.constant 0 : index
    %c0_62 = arith.constant 0 : index
    %152 = vector.load %arg7[%151, %c0_61, %c0_62] : memref<8x2x32xf32, #tpu.memory_space<vmem>>, vector<1x2x32xf32>
    %153 = vector.shape_cast %152 : vector<1x2x32xf32> to vector<2x32xf32>
    %154 = vector.shape_cast %122 : vector<2x32xf32> to vector<1x2x32xf32>
    tpu.vector_store %arg7[%151, %c0_61, %c0_62], %154 {strides = array<i32>} : memref<8x2x32xf32, #tpu.memory_space<vmem>>, vector<1x2x32xf32>,
    %155 = arith.index_cast %86 : i32 to index
    %c0_63 = arith.constant 0 : index
    %c0_64 = arith.constant 0 : index
    %156 = vector.load %arg8[%155, %c0_63, %c0_64] : memref<8x2x32xf32, #tpu.memory_space<vmem>>, vector<1x2x32xf32>
    %157 = vector.shape_cast %156 : vector<1x2x32xf32> to vector<2x32xf32>
    %158 = vector.shape_cast %150 : vector<2x32xf32> to vector<1x2x32xf32>
    tpu.vector_store %arg8[%155, %c0_63, %c0_64], %158 {strides = array<i32>} : memref<8x2x32xf32, #tpu.memory_space<vmem>>, vector<1x2x32xf32>,
    %c2_i32 = arith.constant 2 : i32
    %c7_i32_65 = arith.constant 7 : i32
    %159 = arith.subi %c7_i32_65, %c2_i32 : i32
    %c0_66 = arith.constant 0 : index
    %160 = arith.index_cast %c2_i32 : i32 to index
    %c0_67 = arith.constant 0 : index
    %c0_68 = arith.constant 0 : index
    %161 = vector.load %arg1[%c0_66, %160, %c0_67, %c0_68] : memref<1x8x2x96xf32, #tpu.memory_space<vmem>>, vector<1x1x2x96xf32>
    %162 = vector.shape_cast %161 : vector<1x1x2x96xf32> to vector<2x96xf32>
    %c0_69 = arith.constant 0 : index
    %163 = arith.index_cast %159 : i32 to index
    %c0_70 = arith.constant 0 : index
    %c0_71 = arith.constant 0 : index
    %164 = vector.load %arg2[%c0_69, %163, %c0_70, %c0_71] : memref<1x8x2x96xf32, #tpu.memory_space<vmem>>, vector<1x1x2x96xf32>
    %165 = vector.shape_cast %164 : vector<1x1x2x96xf32> to vector<2x96xf32>
    %cst_72 = arith.constant dense<0.000000e+00> : vector<2x96xf32>
    %166 = tpu.matmul %122, %3, %cst_72 {dimension_numbers = #tpu.dot_dimension_numbers<[1], [0], [0], [1], [0, 0, 1, 1], [], []>} : vector<2x32xf32>, vector<32x96xf32>, vector<2x96xf32> -> vector<2x96xf32>
    %cst_73 = arith.constant dense<0.000000e+00> : vector<2x96xf32>
    %167 = tpu.matmul %150, %4, %cst_73 {dimension_numbers = #tpu.dot_dimension_numbers<[1], [0], [0], [1], [0, 0, 1, 1], [], []>} : vector<2x32xf32>, vector<32x96xf32>, vector<2x96xf32> -> vector<2x96xf32>
    %168 = arith.addf %162, %166 : vector<2x96xf32>
    %169 = vector.extract_strided_slice %168 {offsets = [0, 0], sizes = [2, 32], strides = [1, 1]} : vector<2x96xf32> to vector<2x32xf32>
    %cst_74 = arith.constant 5.000000e-01 : f32
    %170 = vector.broadcast %cst_74 : f32 to vector<2x32xf32>
    %171 = arith.mulf %170, %169 : vector<2x32xf32>
    %172 = math.tanh %171 : vector<2x32xf32>
    %cst_75 = arith.constant 1.000000e+00 : f32
    %173 = vector.broadcast %cst_75 : f32 to vector<2x32xf32>
    %174 = arith.addf %172, %173 : vector<2x32xf32>
    %cst_76 = arith.constant 5.000000e-01 : f32
    %175 = vector.broadcast %cst_76 : f32 to vector<2x32xf32>
    %176 = arith.mulf %175, %174 : vector<2x32xf32>
    %177 = vector.extract_strided_slice %168 {offsets = [0, 32], sizes = [2, 32], strides = [1, 1]} : vector<2x96xf32> to vector<2x32xf32>
    %cst_77 = arith.constant 5.000000e-01 : f32
    %178 = vector.broadcast %cst_77 : f32 to vector<2x32xf32>
    %179 = arith.mulf %178, %177 : vector<2x32xf32>
    %180 = math.tanh %179 : vector<2x32xf32>
    %cst_78 = arith.constant 1.000000e+00 : f32
    %181 = vector.broadcast %cst_78 : f32 to vector<2x32xf32>
    %182 = arith.addf %180, %181 : vector<2x32xf32>
    %cst_79 = arith.constant 5.000000e-01 : f32
    %183 = vector.broadcast %cst_79 : f32 to vector<2x32xf32>
    %184 = arith.mulf %183, %182 : vector<2x32xf32>
    %185 = vector.extract_strided_slice %162 {offsets = [0, 64], sizes = [2, 32], strides = [1, 1]} : vector<2x96xf32> to vector<2x32xf32>
    %186 = vector.extract_strided_slice %166 {offsets = [0, 64], sizes = [2, 32], strides = [1, 1]} : vector<2x96xf32> to vector<2x32xf32>
    %187 = arith.addf %186, %7 : vector<2x32xf32>
    %188 = arith.mulf %176, %187 : vector<2x32xf32>
    %189 = arith.addf %185, %188 : vector<2x32xf32>
    %190 = math.tanh %189 : vector<2x32xf32>
    %cst_80 = arith.constant 1.000000e+00 : f32
    %191 = vector.broadcast %cst_80 : f32 to vector<2x32xf32>
    %192 = arith.subf %191, %184 : vector<2x32xf32>
    %193 = arith.mulf %192, %190 : vector<2x32xf32>
    %194 = arith.mulf %184, %122 : vector<2x32xf32>
    %195 = arith.addf %193, %194 : vector<2x32xf32>
    %196 = arith.addf %165, %167 : vector<2x96xf32>
    %197 = vector.extract_strided_slice %196 {offsets = [0, 0], sizes = [2, 32], strides = [1, 1]} : vector<2x96xf32> to vector<2x32xf32>
    %cst_81 = arith.constant 5.000000e-01 : f32
    %198 = vector.broadcast %cst_81 : f32 to vector<2x32xf32>
    %199 = arith.mulf %198, %197 : vector<2x32xf32>
    %200 = math.tanh %199 : vector<2x32xf32>
    %cst_82 = arith.constant 1.000000e+00 : f32
    %201 = vector.broadcast %cst_82 : f32 to vector<2x32xf32>
    %202 = arith.addf %200, %201 : vector<2x32xf32>
    %cst_83 = arith.constant 5.000000e-01 : f32
    %203 = vector.broadcast %cst_83 : f32 to vector<2x32xf32>
    %204 = arith.mulf %203, %202 : vector<2x32xf32>
    %205 = vector.extract_strided_slice %196 {offsets = [0, 32], sizes = [2, 32], strides = [1, 1]} : vector<2x96xf32> to vector<2x32xf32>
    %cst_84 = arith.constant 5.000000e-01 : f32
    %206 = vector.broadcast %cst_84 : f32 to vector<2x32xf32>
    %207 = arith.mulf %206, %205 : vector<2x32xf32>
    %208 = math.tanh %207 : vector<2x32xf32>
    %cst_85 = arith.constant 1.000000e+00 : f32
    %209 = vector.broadcast %cst_85 : f32 to vector<2x32xf32>
    %210 = arith.addf %208, %209 : vector<2x32xf32>
    %cst_86 = arith.constant 5.000000e-01 : f32
    %211 = vector.broadcast %cst_86 : f32 to vector<2x32xf32>
    %212 = arith.mulf %211, %210 : vector<2x32xf32>
    %213 = vector.extract_strided_slice %165 {offsets = [0, 64], sizes = [2, 32], strides = [1, 1]} : vector<2x96xf32> to vector<2x32xf32>
    %214 = vector.extract_strided_slice %167 {offsets = [0, 64], sizes = [2, 32], strides = [1, 1]} : vector<2x96xf32> to vector<2x32xf32>
    %215 = arith.addf %214, %10 : vector<2x32xf32>
    %216 = arith.mulf %204, %215 : vector<2x32xf32>
    %217 = arith.addf %213, %216 : vector<2x32xf32>
    %218 = math.tanh %217 : vector<2x32xf32>
    %cst_87 = arith.constant 1.000000e+00 : f32
    %219 = vector.broadcast %cst_87 : f32 to vector<2x32xf32>
    %220 = arith.subf %219, %212 : vector<2x32xf32>
    %221 = arith.mulf %220, %218 : vector<2x32xf32>
    %222 = arith.mulf %212, %150 : vector<2x32xf32>
    %223 = arith.addf %221, %222 : vector<2x32xf32>
    %224 = arith.index_cast %c2_i32 : i32 to index
    %c0_88 = arith.constant 0 : index
    %c0_89 = arith.constant 0 : index
    %225 = vector.load %arg7[%224, %c0_88, %c0_89] : memref<8x2x32xf32, #tpu.memory_space<vmem>>, vector<1x2x32xf32>
    %226 = vector.shape_cast %225 : vector<1x2x32xf32> to vector<2x32xf32>
    %227 = vector.shape_cast %195 : vector<2x32xf32> to vector<1x2x32xf32>
    tpu.vector_store %arg7[%224, %c0_88, %c0_89], %227 {strides = array<i32>} : memref<8x2x32xf32, #tpu.memory_space<vmem>>, vector<1x2x32xf32>,
    %228 = arith.index_cast %159 : i32 to index
    %c0_90 = arith.constant 0 : index
    %c0_91 = arith.constant 0 : index
    %229 = vector.load %arg8[%228, %c0_90, %c0_91] : memref<8x2x32xf32, #tpu.memory_space<vmem>>, vector<1x2x32xf32>
    %230 = vector.shape_cast %229 : vector<1x2x32xf32> to vector<2x32xf32>
    %231 = vector.shape_cast %223 : vector<2x32xf32> to vector<1x2x32xf32>
    tpu.vector_store %arg8[%228, %c0_90, %c0_91], %231 {strides = array<i32>} : memref<8x2x32xf32, #tpu.memory_space<vmem>>, vector<1x2x32xf32>,
    %c3_i32 = arith.constant 3 : i32
    %c7_i32_92 = arith.constant 7 : i32
    %232 = arith.subi %c7_i32_92, %c3_i32 : i32
    %c0_93 = arith.constant 0 : index
    %233 = arith.index_cast %c3_i32 : i32 to index
    %c0_94 = arith.constant 0 : index
    %c0_95 = arith.constant 0 : index
    %234 = vector.load %arg1[%c0_93, %233, %c0_94, %c0_95] : memref<1x8x2x96xf32, #tpu.memory_space<vmem>>, vector<1x1x2x96xf32>
    %235 = vector.shape_cast %234 : vector<1x1x2x96xf32> to vector<2x96xf32>
    %c0_96 = arith.constant 0 : index
    %236 = arith.index_cast %232 : i32 to index
    %c0_97 = arith.constant 0 : index
    %c0_98 = arith.constant 0 : index
    %237 = vector.load %arg2[%c0_96, %236, %c0_97, %c0_98] : memref<1x8x2x96xf32, #tpu.memory_space<vmem>>, vector<1x1x2x96xf32>
    %238 = vector.shape_cast %237 : vector<1x1x2x96xf32> to vector<2x96xf32>
    %cst_99 = arith.constant dense<0.000000e+00> : vector<2x96xf32>
    %239 = tpu.matmul %195, %3, %cst_99 {dimension_numbers = #tpu.dot_dimension_numbers<[1], [0], [0], [1], [0, 0, 1, 1], [], []>} : vector<2x32xf32>, vector<32x96xf32>, vector<2x96xf32> -> vector<2x96xf32>
    %cst_100 = arith.constant dense<0.000000e+00> : vector<2x96xf32>
    %240 = tpu.matmul %223, %4, %cst_100 {dimension_numbers = #tpu.dot_dimension_numbers<[1], [0], [0], [1], [0, 0, 1, 1], [], []>} : vector<2x32xf32>, vector<32x96xf32>, vector<2x96xf32> -> vector<2x96xf32>
    %241 = arith.addf %235, %239 : vector<2x96xf32>
    %242 = vector.extract_strided_slice %241 {offsets = [0, 0], sizes = [2, 32], strides = [1, 1]} : vector<2x96xf32> to vector<2x32xf32>
    %cst_101 = arith.constant 5.000000e-01 : f32
    %243 = vector.broadcast %cst_101 : f32 to vector<2x32xf32>
    %244 = arith.mulf %243, %242 : vector<2x32xf32>
    %245 = math.tanh %244 : vector<2x32xf32>
    %cst_102 = arith.constant 1.000000e+00 : f32
    %246 = vector.broadcast %cst_102 : f32 to vector<2x32xf32>
    %247 = arith.addf %245, %246 : vector<2x32xf32>
    %cst_103 = arith.constant 5.000000e-01 : f32
    %248 = vector.broadcast %cst_103 : f32 to vector<2x32xf32>
    %249 = arith.mulf %248, %247 : vector<2x32xf32>
    %250 = vector.extract_strided_slice %241 {offsets = [0, 32], sizes = [2, 32], strides = [1, 1]} : vector<2x96xf32> to vector<2x32xf32>
    %cst_104 = arith.constant 5.000000e-01 : f32
    %251 = vector.broadcast %cst_104 : f32 to vector<2x32xf32>
    %252 = arith.mulf %251, %250 : vector<2x32xf32>
    %253 = math.tanh %252 : vector<2x32xf32>
    %cst_105 = arith.constant 1.000000e+00 : f32
    %254 = vector.broadcast %cst_105 : f32 to vector<2x32xf32>
    %255 = arith.addf %253, %254 : vector<2x32xf32>
    %cst_106 = arith.constant 5.000000e-01 : f32
    %256 = vector.broadcast %cst_106 : f32 to vector<2x32xf32>
    %257 = arith.mulf %256, %255 : vector<2x32xf32>
    %258 = vector.extract_strided_slice %235 {offsets = [0, 64], sizes = [2, 32], strides = [1, 1]} : vector<2x96xf32> to vector<2x32xf32>
    %259 = vector.extract_strided_slice %239 {offsets = [0, 64], sizes = [2, 32], strides = [1, 1]} : vector<2x96xf32> to vector<2x32xf32>
    %260 = arith.addf %259, %7 : vector<2x32xf32>
    %261 = arith.mulf %249, %260 : vector<2x32xf32>
    %262 = arith.addf %258, %261 : vector<2x32xf32>
    %263 = math.tanh %262 : vector<2x32xf32>
    %cst_107 = arith.constant 1.000000e+00 : f32
    %264 = vector.broadcast %cst_107 : f32 to vector<2x32xf32>
    %265 = arith.subf %264, %257 : vector<2x32xf32>
    %266 = arith.mulf %265, %263 : vector<2x32xf32>
    %267 = arith.mulf %257, %195 : vector<2x32xf32>
    %268 = arith.addf %266, %267 : vector<2x32xf32>
    %269 = arith.addf %238, %240 : vector<2x96xf32>
    %270 = vector.extract_strided_slice %269 {offsets = [0, 0], sizes = [2, 32], strides = [1, 1]} : vector<2x96xf32> to vector<2x32xf32>
    %cst_108 = arith.constant 5.000000e-01 : f32
    %271 = vector.broadcast %cst_108 : f32 to vector<2x32xf32>
    %272 = arith.mulf %271, %270 : vector<2x32xf32>
    %273 = math.tanh %272 : vector<2x32xf32>
    %cst_109 = arith.constant 1.000000e+00 : f32
    %274 = vector.broadcast %cst_109 : f32 to vector<2x32xf32>
    %275 = arith.addf %273, %274 : vector<2x32xf32>
    %cst_110 = arith.constant 5.000000e-01 : f32
    %276 = vector.broadcast %cst_110 : f32 to vector<2x32xf32>
    %277 = arith.mulf %276, %275 : vector<2x32xf32>
    %278 = vector.extract_strided_slice %269 {offsets = [0, 32], sizes = [2, 32], strides = [1, 1]} : vector<2x96xf32> to vector<2x32xf32>
    %cst_111 = arith.constant 5.000000e-01 : f32
    %279 = vector.broadcast %cst_111 : f32 to vector<2x32xf32>
    %280 = arith.mulf %279, %278 : vector<2x32xf32>
    %281 = math.tanh %280 : vector<2x32xf32>
    %cst_112 = arith.constant 1.000000e+00 : f32
    %282 = vector.broadcast %cst_112 : f32 to vector<2x32xf32>
    %283 = arith.addf %281, %282 : vector<2x32xf32>
    %cst_113 = arith.constant 5.000000e-01 : f32
    %284 = vector.broadcast %cst_113 : f32 to vector<2x32xf32>
    %285 = arith.mulf %284, %283 : vector<2x32xf32>
    %286 = vector.extract_strided_slice %238 {offsets = [0, 64], sizes = [2, 32], strides = [1, 1]} : vector<2x96xf32> to vector<2x32xf32>
    %287 = vector.extract_strided_slice %240 {offsets = [0, 64], sizes = [2, 32], strides = [1, 1]} : vector<2x96xf32> to vector<2x32xf32>
    %288 = arith.addf %287, %10 : vector<2x32xf32>
    %289 = arith.mulf %277, %288 : vector<2x32xf32>
    %290 = arith.addf %286, %289 : vector<2x32xf32>
    %291 = math.tanh %290 : vector<2x32xf32>
    %cst_114 = arith.constant 1.000000e+00 : f32
    %292 = vector.broadcast %cst_114 : f32 to vector<2x32xf32>
    %293 = arith.subf %292, %285 : vector<2x32xf32>
    %294 = arith.mulf %293, %291 : vector<2x32xf32>
    %295 = arith.mulf %285, %223 : vector<2x32xf32>
    %296 = arith.addf %294, %295 : vector<2x32xf32>
    %297 = arith.index_cast %c3_i32 : i32 to index
    %c0_115 = arith.constant 0 : index
    %c0_116 = arith.constant 0 : index
    %298 = vector.load %arg7[%297, %c0_115, %c0_116] : memref<8x2x32xf32, #tpu.memory_space<vmem>>, vector<1x2x32xf32>
    %299 = vector.shape_cast %298 : vector<1x2x32xf32> to vector<2x32xf32>
    %300 = vector.shape_cast %268 : vector<2x32xf32> to vector<1x2x32xf32>
    tpu.vector_store %arg7[%297, %c0_115, %c0_116], %300 {strides = array<i32>} : memref<8x2x32xf32, #tpu.memory_space<vmem>>, vector<1x2x32xf32>,
    %301 = arith.index_cast %232 : i32 to index
    %c0_117 = arith.constant 0 : index
    %c0_118 = arith.constant 0 : index
    %302 = vector.load %arg8[%301, %c0_117, %c0_118] : memref<8x2x32xf32, #tpu.memory_space<vmem>>, vector<1x2x32xf32>
    %303 = vector.shape_cast %302 : vector<1x2x32xf32> to vector<2x32xf32>
    %304 = vector.shape_cast %296 : vector<2x32xf32> to vector<1x2x32xf32>
    tpu.vector_store %arg8[%301, %c0_117, %c0_118], %304 {strides = array<i32>} : memref<8x2x32xf32, #tpu.memory_space<vmem>>, vector<1x2x32xf32>,
    %c4_i32 = arith.constant 4 : i32
    %c7_i32_119 = arith.constant 7 : i32
    %305 = arith.subi %c7_i32_119, %c4_i32 : i32
    %c0_120 = arith.constant 0 : index
    %306 = arith.index_cast %c4_i32 : i32 to index
    %c0_121 = arith.constant 0 : index
    %c0_122 = arith.constant 0 : index
    %307 = vector.load %arg1[%c0_120, %306, %c0_121, %c0_122] : memref<1x8x2x96xf32, #tpu.memory_space<vmem>>, vector<1x1x2x96xf32>
    %308 = vector.shape_cast %307 : vector<1x1x2x96xf32> to vector<2x96xf32>
    %c0_123 = arith.constant 0 : index
    %309 = arith.index_cast %305 : i32 to index
    %c0_124 = arith.constant 0 : index
    %c0_125 = arith.constant 0 : index
    %310 = vector.load %arg2[%c0_123, %309, %c0_124, %c0_125] : memref<1x8x2x96xf32, #tpu.memory_space<vmem>>, vector<1x1x2x96xf32>
    %311 = vector.shape_cast %310 : vector<1x1x2x96xf32> to vector<2x96xf32>
    %cst_126 = arith.constant dense<0.000000e+00> : vector<2x96xf32>
    %312 = tpu.matmul %268, %3, %cst_126 {dimension_numbers = #tpu.dot_dimension_numbers<[1], [0], [0], [1], [0, 0, 1, 1], [], []>} : vector<2x32xf32>, vector<32x96xf32>, vector<2x96xf32> -> vector<2x96xf32>
    %cst_127 = arith.constant dense<0.000000e+00> : vector<2x96xf32>
    %313 = tpu.matmul %296, %4, %cst_127 {dimension_numbers = #tpu.dot_dimension_numbers<[1], [0], [0], [1], [0, 0, 1, 1], [], []>} : vector<2x32xf32>, vector<32x96xf32>, vector<2x96xf32> -> vector<2x96xf32>
    %314 = arith.addf %308, %312 : vector<2x96xf32>
    %315 = vector.extract_strided_slice %314 {offsets = [0, 0], sizes = [2, 32], strides = [1, 1]} : vector<2x96xf32> to vector<2x32xf32>
    %cst_128 = arith.constant 5.000000e-01 : f32
    %316 = vector.broadcast %cst_128 : f32 to vector<2x32xf32>
    %317 = arith.mulf %316, %315 : vector<2x32xf32>
    %318 = math.tanh %317 : vector<2x32xf32>
    %cst_129 = arith.constant 1.000000e+00 : f32
    %319 = vector.broadcast %cst_129 : f32 to vector<2x32xf32>
    %320 = arith.addf %318, %319 : vector<2x32xf32>
    %cst_130 = arith.constant 5.000000e-01 : f32
    %321 = vector.broadcast %cst_130 : f32 to vector<2x32xf32>
    %322 = arith.mulf %321, %320 : vector<2x32xf32>
    %323 = vector.extract_strided_slice %314 {offsets = [0, 32], sizes = [2, 32], strides = [1, 1]} : vector<2x96xf32> to vector<2x32xf32>
    %cst_131 = arith.constant 5.000000e-01 : f32
    %324 = vector.broadcast %cst_131 : f32 to vector<2x32xf32>
    %325 = arith.mulf %324, %323 : vector<2x32xf32>
    %326 = math.tanh %325 : vector<2x32xf32>
    %cst_132 = arith.constant 1.000000e+00 : f32
    %327 = vector.broadcast %cst_132 : f32 to vector<2x32xf32>
    %328 = arith.addf %326, %327 : vector<2x32xf32>
    %cst_133 = arith.constant 5.000000e-01 : f32
    %329 = vector.broadcast %cst_133 : f32 to vector<2x32xf32>
    %330 = arith.mulf %329, %328 : vector<2x32xf32>
    %331 = vector.extract_strided_slice %308 {offsets = [0, 64], sizes = [2, 32], strides = [1, 1]} : vector<2x96xf32> to vector<2x32xf32>
    %332 = vector.extract_strided_slice %312 {offsets = [0, 64], sizes = [2, 32], strides = [1, 1]} : vector<2x96xf32> to vector<2x32xf32>
    %333 = arith.addf %332, %7 : vector<2x32xf32>
    %334 = arith.mulf %322, %333 : vector<2x32xf32>
    %335 = arith.addf %331, %334 : vector<2x32xf32>
    %336 = math.tanh %335 : vector<2x32xf32>
    %cst_134 = arith.constant 1.000000e+00 : f32
    %337 = vector.broadcast %cst_134 : f32 to vector<2x32xf32>
    %338 = arith.subf %337, %330 : vector<2x32xf32>
    %339 = arith.mulf %338, %336 : vector<2x32xf32>
    %340 = arith.mulf %330, %268 : vector<2x32xf32>
    %341 = arith.addf %339, %340 : vector<2x32xf32>
    %342 = arith.addf %311, %313 : vector<2x96xf32>
    %343 = vector.extract_strided_slice %342 {offsets = [0, 0], sizes = [2, 32], strides = [1, 1]} : vector<2x96xf32> to vector<2x32xf32>
    %cst_135 = arith.constant 5.000000e-01 : f32
    %344 = vector.broadcast %cst_135 : f32 to vector<2x32xf32>
    %345 = arith.mulf %344, %343 : vector<2x32xf32>
    %346 = math.tanh %345 : vector<2x32xf32>
    %cst_136 = arith.constant 1.000000e+00 : f32
    %347 = vector.broadcast %cst_136 : f32 to vector<2x32xf32>
    %348 = arith.addf %346, %347 : vector<2x32xf32>
    %cst_137 = arith.constant 5.000000e-01 : f32
    %349 = vector.broadcast %cst_137 : f32 to vector<2x32xf32>
    %350 = arith.mulf %349, %348 : vector<2x32xf32>
    %351 = vector.extract_strided_slice %342 {offsets = [0, 32], sizes = [2, 32], strides = [1, 1]} : vector<2x96xf32> to vector<2x32xf32>
    %cst_138 = arith.constant 5.000000e-01 : f32
    %352 = vector.broadcast %cst_138 : f32 to vector<2x32xf32>
    %353 = arith.mulf %352, %351 : vector<2x32xf32>
    %354 = math.tanh %353 : vector<2x32xf32>
    %cst_139 = arith.constant 1.000000e+00 : f32
    %355 = vector.broadcast %cst_139 : f32 to vector<2x32xf32>
    %356 = arith.addf %354, %355 : vector<2x32xf32>
    %cst_140 = arith.constant 5.000000e-01 : f32
    %357 = vector.broadcast %cst_140 : f32 to vector<2x32xf32>
    %358 = arith.mulf %357, %356 : vector<2x32xf32>
    %359 = vector.extract_strided_slice %311 {offsets = [0, 64], sizes = [2, 32], strides = [1, 1]} : vector<2x96xf32> to vector<2x32xf32>
    %360 = vector.extract_strided_slice %313 {offsets = [0, 64], sizes = [2, 32], strides = [1, 1]} : vector<2x96xf32> to vector<2x32xf32>
    %361 = arith.addf %360, %10 : vector<2x32xf32>
    %362 = arith.mulf %350, %361 : vector<2x32xf32>
    %363 = arith.addf %359, %362 : vector<2x32xf32>
    %364 = math.tanh %363 : vector<2x32xf32>
    %cst_141 = arith.constant 1.000000e+00 : f32
    %365 = vector.broadcast %cst_141 : f32 to vector<2x32xf32>
    %366 = arith.subf %365, %358 : vector<2x32xf32>
    %367 = arith.mulf %366, %364 : vector<2x32xf32>
    %368 = arith.mulf %358, %296 : vector<2x32xf32>
    %369 = arith.addf %367, %368 : vector<2x32xf32>
    %370 = arith.index_cast %c4_i32 : i32 to index
    %c0_142 = arith.constant 0 : index
    %c0_143 = arith.constant 0 : index
    %371 = vector.load %arg7[%370, %c0_142, %c0_143] : memref<8x2x32xf32, #tpu.memory_space<vmem>>, vector<1x2x32xf32>
    %372 = vector.shape_cast %371 : vector<1x2x32xf32> to vector<2x32xf32>
    %373 = vector.shape_cast %341 : vector<2x32xf32> to vector<1x2x32xf32>
    tpu.vector_store %arg7[%370, %c0_142, %c0_143], %373 {strides = array<i32>} : memref<8x2x32xf32, #tpu.memory_space<vmem>>, vector<1x2x32xf32>,
    %374 = arith.index_cast %305 : i32 to index
    %c0_144 = arith.constant 0 : index
    %c0_145 = arith.constant 0 : index
    %375 = vector.load %arg8[%374, %c0_144, %c0_145] : memref<8x2x32xf32, #tpu.memory_space<vmem>>, vector<1x2x32xf32>
    %376 = vector.shape_cast %375 : vector<1x2x32xf32> to vector<2x32xf32>
    %377 = vector.shape_cast %369 : vector<2x32xf32> to vector<1x2x32xf32>
    tpu.vector_store %arg8[%374, %c0_144, %c0_145], %377 {strides = array<i32>} : memref<8x2x32xf32, #tpu.memory_space<vmem>>, vector<1x2x32xf32>,
    %c5_i32 = arith.constant 5 : i32
    %c7_i32_146 = arith.constant 7 : i32
    %378 = arith.subi %c7_i32_146, %c5_i32 : i32
    %c0_147 = arith.constant 0 : index
    %379 = arith.index_cast %c5_i32 : i32 to index
    %c0_148 = arith.constant 0 : index
    %c0_149 = arith.constant 0 : index
    %380 = vector.load %arg1[%c0_147, %379, %c0_148, %c0_149] : memref<1x8x2x96xf32, #tpu.memory_space<vmem>>, vector<1x1x2x96xf32>
    %381 = vector.shape_cast %380 : vector<1x1x2x96xf32> to vector<2x96xf32>
    %c0_150 = arith.constant 0 : index
    %382 = arith.index_cast %378 : i32 to index
    %c0_151 = arith.constant 0 : index
    %c0_152 = arith.constant 0 : index
    %383 = vector.load %arg2[%c0_150, %382, %c0_151, %c0_152] : memref<1x8x2x96xf32, #tpu.memory_space<vmem>>, vector<1x1x2x96xf32>
    %384 = vector.shape_cast %383 : vector<1x1x2x96xf32> to vector<2x96xf32>
    %cst_153 = arith.constant dense<0.000000e+00> : vector<2x96xf32>
    %385 = tpu.matmul %341, %3, %cst_153 {dimension_numbers = #tpu.dot_dimension_numbers<[1], [0], [0], [1], [0, 0, 1, 1], [], []>} : vector<2x32xf32>, vector<32x96xf32>, vector<2x96xf32> -> vector<2x96xf32>
    %cst_154 = arith.constant dense<0.000000e+00> : vector<2x96xf32>
    %386 = tpu.matmul %369, %4, %cst_154 {dimension_numbers = #tpu.dot_dimension_numbers<[1], [0], [0], [1], [0, 0, 1, 1], [], []>} : vector<2x32xf32>, vector<32x96xf32>, vector<2x96xf32> -> vector<2x96xf32>
    %387 = arith.addf %381, %385 : vector<2x96xf32>
    %388 = vector.extract_strided_slice %387 {offsets = [0, 0], sizes = [2, 32], strides = [1, 1]} : vector<2x96xf32> to vector<2x32xf32>
    %cst_155 = arith.constant 5.000000e-01 : f32
    %389 = vector.broadcast %cst_155 : f32 to vector<2x32xf32>
    %390 = arith.mulf %389, %388 : vector<2x32xf32>
    %391 = math.tanh %390 : vector<2x32xf32>
    %cst_156 = arith.constant 1.000000e+00 : f32
    %392 = vector.broadcast %cst_156 : f32 to vector<2x32xf32>
    %393 = arith.addf %391, %392 : vector<2x32xf32>
    %cst_157 = arith.constant 5.000000e-01 : f32
    %394 = vector.broadcast %cst_157 : f32 to vector<2x32xf32>
    %395 = arith.mulf %394, %393 : vector<2x32xf32>
    %396 = vector.extract_strided_slice %387 {offsets = [0, 32], sizes = [2, 32], strides = [1, 1]} : vector<2x96xf32> to vector<2x32xf32>
    %cst_158 = arith.constant 5.000000e-01 : f32
    %397 = vector.broadcast %cst_158 : f32 to vector<2x32xf32>
    %398 = arith.mulf %397, %396 : vector<2x32xf32>
    %399 = math.tanh %398 : vector<2x32xf32>
    %cst_159 = arith.constant 1.000000e+00 : f32
    %400 = vector.broadcast %cst_159 : f32 to vector<2x32xf32>
    %401 = arith.addf %399, %400 : vector<2x32xf32>
    %cst_160 = arith.constant 5.000000e-01 : f32
    %402 = vector.broadcast %cst_160 : f32 to vector<2x32xf32>
    %403 = arith.mulf %402, %401 : vector<2x32xf32>
    %404 = vector.extract_strided_slice %381 {offsets = [0, 64], sizes = [2, 32], strides = [1, 1]} : vector<2x96xf32> to vector<2x32xf32>
    %405 = vector.extract_strided_slice %385 {offsets = [0, 64], sizes = [2, 32], strides = [1, 1]} : vector<2x96xf32> to vector<2x32xf32>
    %406 = arith.addf %405, %7 : vector<2x32xf32>
    %407 = arith.mulf %395, %406 : vector<2x32xf32>
    %408 = arith.addf %404, %407 : vector<2x32xf32>
    %409 = math.tanh %408 : vector<2x32xf32>
    %cst_161 = arith.constant 1.000000e+00 : f32
    %410 = vector.broadcast %cst_161 : f32 to vector<2x32xf32>
    %411 = arith.subf %410, %403 : vector<2x32xf32>
    %412 = arith.mulf %411, %409 : vector<2x32xf32>
    %413 = arith.mulf %403, %341 : vector<2x32xf32>
    %414 = arith.addf %412, %413 : vector<2x32xf32>
    %415 = arith.addf %384, %386 : vector<2x96xf32>
    %416 = vector.extract_strided_slice %415 {offsets = [0, 0], sizes = [2, 32], strides = [1, 1]} : vector<2x96xf32> to vector<2x32xf32>
    %cst_162 = arith.constant 5.000000e-01 : f32
    %417 = vector.broadcast %cst_162 : f32 to vector<2x32xf32>
    %418 = arith.mulf %417, %416 : vector<2x32xf32>
    %419 = math.tanh %418 : vector<2x32xf32>
    %cst_163 = arith.constant 1.000000e+00 : f32
    %420 = vector.broadcast %cst_163 : f32 to vector<2x32xf32>
    %421 = arith.addf %419, %420 : vector<2x32xf32>
    %cst_164 = arith.constant 5.000000e-01 : f32
    %422 = vector.broadcast %cst_164 : f32 to vector<2x32xf32>
    %423 = arith.mulf %422, %421 : vector<2x32xf32>
    %424 = vector.extract_strided_slice %415 {offsets = [0, 32], sizes = [2, 32], strides = [1, 1]} : vector<2x96xf32> to vector<2x32xf32>
    %cst_165 = arith.constant 5.000000e-01 : f32
    %425 = vector.broadcast %cst_165 : f32 to vector<2x32xf32>
    %426 = arith.mulf %425, %424 : vector<2x32xf32>
    %427 = math.tanh %426 : vector<2x32xf32>
    %cst_166 = arith.constant 1.000000e+00 : f32
    %428 = vector.broadcast %cst_166 : f32 to vector<2x32xf32>
    %429 = arith.addf %427, %428 : vector<2x32xf32>
    %cst_167 = arith.constant 5.000000e-01 : f32
    %430 = vector.broadcast %cst_167 : f32 to vector<2x32xf32>
    %431 = arith.mulf %430, %429 : vector<2x32xf32>
    %432 = vector.extract_strided_slice %384 {offsets = [0, 64], sizes = [2, 32], strides = [1, 1]} : vector<2x96xf32> to vector<2x32xf32>
    %433 = vector.extract_strided_slice %386 {offsets = [0, 64], sizes = [2, 32], strides = [1, 1]} : vector<2x96xf32> to vector<2x32xf32>
    %434 = arith.addf %433, %10 : vector<2x32xf32>
    %435 = arith.mulf %423, %434 : vector<2x32xf32>
    %436 = arith.addf %432, %435 : vector<2x32xf32>
    %437 = math.tanh %436 : vector<2x32xf32>
    %cst_168 = arith.constant 1.000000e+00 : f32
    %438 = vector.broadcast %cst_168 : f32 to vector<2x32xf32>
    %439 = arith.subf %438, %431 : vector<2x32xf32>
    %440 = arith.mulf %439, %437 : vector<2x32xf32>
    %441 = arith.mulf %431, %369 : vector<2x32xf32>
    %442 = arith.addf %440, %441 : vector<2x32xf32>
    %443 = arith.index_cast %c5_i32 : i32 to index
    %c0_169 = arith.constant 0 : index
    %c0_170 = arith.constant 0 : index
    %444 = vector.load %arg7[%443, %c0_169, %c0_170] : memref<8x2x32xf32, #tpu.memory_space<vmem>>, vector<1x2x32xf32>
    %445 = vector.shape_cast %444 : vector<1x2x32xf32> to vector<2x32xf32>
    %446 = vector.shape_cast %414 : vector<2x32xf32> to vector<1x2x32xf32>
    tpu.vector_store %arg7[%443, %c0_169, %c0_170], %446 {strides = array<i32>} : memref<8x2x32xf32, #tpu.memory_space<vmem>>, vector<1x2x32xf32>,
    %447 = arith.index_cast %378 : i32 to index
    %c0_171 = arith.constant 0 : index
    %c0_172 = arith.constant 0 : index
    %448 = vector.load %arg8[%447, %c0_171, %c0_172] : memref<8x2x32xf32, #tpu.memory_space<vmem>>, vector<1x2x32xf32>
    %449 = vector.shape_cast %448 : vector<1x2x32xf32> to vector<2x32xf32>
    %450 = vector.shape_cast %442 : vector<2x32xf32> to vector<1x2x32xf32>
    tpu.vector_store %arg8[%447, %c0_171, %c0_172], %450 {strides = array<i32>} : memref<8x2x32xf32, #tpu.memory_space<vmem>>, vector<1x2x32xf32>,
    %c6_i32 = arith.constant 6 : i32
    %c7_i32_173 = arith.constant 7 : i32
    %451 = arith.subi %c7_i32_173, %c6_i32 : i32
    %c0_174 = arith.constant 0 : index
    %452 = arith.index_cast %c6_i32 : i32 to index
    %c0_175 = arith.constant 0 : index
    %c0_176 = arith.constant 0 : index
    %453 = vector.load %arg1[%c0_174, %452, %c0_175, %c0_176] : memref<1x8x2x96xf32, #tpu.memory_space<vmem>>, vector<1x1x2x96xf32>
    %454 = vector.shape_cast %453 : vector<1x1x2x96xf32> to vector<2x96xf32>
    %c0_177 = arith.constant 0 : index
    %455 = arith.index_cast %451 : i32 to index
    %c0_178 = arith.constant 0 : index
    %c0_179 = arith.constant 0 : index
    %456 = vector.load %arg2[%c0_177, %455, %c0_178, %c0_179] : memref<1x8x2x96xf32, #tpu.memory_space<vmem>>, vector<1x1x2x96xf32>
    %457 = vector.shape_cast %456 : vector<1x1x2x96xf32> to vector<2x96xf32>
    %cst_180 = arith.constant dense<0.000000e+00> : vector<2x96xf32>
    %458 = tpu.matmul %414, %3, %cst_180 {dimension_numbers = #tpu.dot_dimension_numbers<[1], [0], [0], [1], [0, 0, 1, 1], [], []>} : vector<2x32xf32>, vector<32x96xf32>, vector<2x96xf32> -> vector<2x96xf32>
    %cst_181 = arith.constant dense<0.000000e+00> : vector<2x96xf32>
    %459 = tpu.matmul %442, %4, %cst_181 {dimension_numbers = #tpu.dot_dimension_numbers<[1], [0], [0], [1], [0, 0, 1, 1], [], []>} : vector<2x32xf32>, vector<32x96xf32>, vector<2x96xf32> -> vector<2x96xf32>
    %460 = arith.addf %454, %458 : vector<2x96xf32>
    %461 = vector.extract_strided_slice %460 {offsets = [0, 0], sizes = [2, 32], strides = [1, 1]} : vector<2x96xf32> to vector<2x32xf32>
    %cst_182 = arith.constant 5.000000e-01 : f32
    %462 = vector.broadcast %cst_182 : f32 to vector<2x32xf32>
    %463 = arith.mulf %462, %461 : vector<2x32xf32>
    %464 = math.tanh %463 : vector<2x32xf32>
    %cst_183 = arith.constant 1.000000e+00 : f32
    %465 = vector.broadcast %cst_183 : f32 to vector<2x32xf32>
    %466 = arith.addf %464, %465 : vector<2x32xf32>
    %cst_184 = arith.constant 5.000000e-01 : f32
    %467 = vector.broadcast %cst_184 : f32 to vector<2x32xf32>
    %468 = arith.mulf %467, %466 : vector<2x32xf32>
    %469 = vector.extract_strided_slice %460 {offsets = [0, 32], sizes = [2, 32], strides = [1, 1]} : vector<2x96xf32> to vector<2x32xf32>
    %cst_185 = arith.constant 5.000000e-01 : f32
    %470 = vector.broadcast %cst_185 : f32 to vector<2x32xf32>
    %471 = arith.mulf %470, %469 : vector<2x32xf32>
    %472 = math.tanh %471 : vector<2x32xf32>
    %cst_186 = arith.constant 1.000000e+00 : f32
    %473 = vector.broadcast %cst_186 : f32 to vector<2x32xf32>
    %474 = arith.addf %472, %473 : vector<2x32xf32>
    %cst_187 = arith.constant 5.000000e-01 : f32
    %475 = vector.broadcast %cst_187 : f32 to vector<2x32xf32>
    %476 = arith.mulf %475, %474 : vector<2x32xf32>
    %477 = vector.extract_strided_slice %454 {offsets = [0, 64], sizes = [2, 32], strides = [1, 1]} : vector<2x96xf32> to vector<2x32xf32>
    %478 = vector.extract_strided_slice %458 {offsets = [0, 64], sizes = [2, 32], strides = [1, 1]} : vector<2x96xf32> to vector<2x32xf32>
    %479 = arith.addf %478, %7 : vector<2x32xf32>
    %480 = arith.mulf %468, %479 : vector<2x32xf32>
    %481 = arith.addf %477, %480 : vector<2x32xf32>
    %482 = math.tanh %481 : vector<2x32xf32>
    %cst_188 = arith.constant 1.000000e+00 : f32
    %483 = vector.broadcast %cst_188 : f32 to vector<2x32xf32>
    %484 = arith.subf %483, %476 : vector<2x32xf32>
    %485 = arith.mulf %484, %482 : vector<2x32xf32>
    %486 = arith.mulf %476, %414 : vector<2x32xf32>
    %487 = arith.addf %485, %486 : vector<2x32xf32>
    %488 = arith.addf %457, %459 : vector<2x96xf32>
    %489 = vector.extract_strided_slice %488 {offsets = [0, 0], sizes = [2, 32], strides = [1, 1]} : vector<2x96xf32> to vector<2x32xf32>
    %cst_189 = arith.constant 5.000000e-01 : f32
    %490 = vector.broadcast %cst_189 : f32 to vector<2x32xf32>
    %491 = arith.mulf %490, %489 : vector<2x32xf32>
    %492 = math.tanh %491 : vector<2x32xf32>
    %cst_190 = arith.constant 1.000000e+00 : f32
    %493 = vector.broadcast %cst_190 : f32 to vector<2x32xf32>
    %494 = arith.addf %492, %493 : vector<2x32xf32>
    %cst_191 = arith.constant 5.000000e-01 : f32
    %495 = vector.broadcast %cst_191 : f32 to vector<2x32xf32>
    %496 = arith.mulf %495, %494 : vector<2x32xf32>
    %497 = vector.extract_strided_slice %488 {offsets = [0, 32], sizes = [2, 32], strides = [1, 1]} : vector<2x96xf32> to vector<2x32xf32>
    %cst_192 = arith.constant 5.000000e-01 : f32
    %498 = vector.broadcast %cst_192 : f32 to vector<2x32xf32>
    %499 = arith.mulf %498, %497 : vector<2x32xf32>
    %500 = math.tanh %499 : vector<2x32xf32>
    %cst_193 = arith.constant 1.000000e+00 : f32
    %501 = vector.broadcast %cst_193 : f32 to vector<2x32xf32>
    %502 = arith.addf %500, %501 : vector<2x32xf32>
    %cst_194 = arith.constant 5.000000e-01 : f32
    %503 = vector.broadcast %cst_194 : f32 to vector<2x32xf32>
    %504 = arith.mulf %503, %502 : vector<2x32xf32>
    %505 = vector.extract_strided_slice %457 {offsets = [0, 64], sizes = [2, 32], strides = [1, 1]} : vector<2x96xf32> to vector<2x32xf32>
    %506 = vector.extract_strided_slice %459 {offsets = [0, 64], sizes = [2, 32], strides = [1, 1]} : vector<2x96xf32> to vector<2x32xf32>
    %507 = arith.addf %506, %10 : vector<2x32xf32>
    %508 = arith.mulf %496, %507 : vector<2x32xf32>
    %509 = arith.addf %505, %508 : vector<2x32xf32>
    %510 = math.tanh %509 : vector<2x32xf32>
    %cst_195 = arith.constant 1.000000e+00 : f32
    %511 = vector.broadcast %cst_195 : f32 to vector<2x32xf32>
    %512 = arith.subf %511, %504 : vector<2x32xf32>
    %513 = arith.mulf %512, %510 : vector<2x32xf32>
    %514 = arith.mulf %504, %442 : vector<2x32xf32>
    %515 = arith.addf %513, %514 : vector<2x32xf32>
    %516 = arith.index_cast %c6_i32 : i32 to index
    %c0_196 = arith.constant 0 : index
    %c0_197 = arith.constant 0 : index
    %517 = vector.load %arg7[%516, %c0_196, %c0_197] : memref<8x2x32xf32, #tpu.memory_space<vmem>>, vector<1x2x32xf32>
    %518 = vector.shape_cast %517 : vector<1x2x32xf32> to vector<2x32xf32>
    %519 = vector.shape_cast %487 : vector<2x32xf32> to vector<1x2x32xf32>
    tpu.vector_store %arg7[%516, %c0_196, %c0_197], %519 {strides = array<i32>} : memref<8x2x32xf32, #tpu.memory_space<vmem>>, vector<1x2x32xf32>,
    %520 = arith.index_cast %451 : i32 to index
    %c0_198 = arith.constant 0 : index
    %c0_199 = arith.constant 0 : index
    %521 = vector.load %arg8[%520, %c0_198, %c0_199] : memref<8x2x32xf32, #tpu.memory_space<vmem>>, vector<1x2x32xf32>
    %522 = vector.shape_cast %521 : vector<1x2x32xf32> to vector<2x32xf32>
    %523 = vector.shape_cast %515 : vector<2x32xf32> to vector<1x2x32xf32>
    tpu.vector_store %arg8[%520, %c0_198, %c0_199], %523 {strides = array<i32>} : memref<8x2x32xf32, #tpu.memory_space<vmem>>, vector<1x2x32xf32>,
    %c7_i32_200 = arith.constant 7 : i32
    %c7_i32_201 = arith.constant 7 : i32
    %524 = arith.subi %c7_i32_201, %c7_i32_200 : i32
    %c0_202 = arith.constant 0 : index
    %525 = arith.index_cast %c7_i32_200 : i32 to index
    %c0_203 = arith.constant 0 : index
    %c0_204 = arith.constant 0 : index
    %526 = vector.load %arg1[%c0_202, %525, %c0_203, %c0_204] : memref<1x8x2x96xf32, #tpu.memory_space<vmem>>, vector<1x1x2x96xf32>
    %527 = vector.shape_cast %526 : vector<1x1x2x96xf32> to vector<2x96xf32>
    %c0_205 = arith.constant 0 : index
    %528 = arith.index_cast %524 : i32 to index
    %c0_206 = arith.constant 0 : index
    %c0_207 = arith.constant 0 : index
    %529 = vector.load %arg2[%c0_205, %528, %c0_206, %c0_207] : memref<1x8x2x96xf32, #tpu.memory_space<vmem>>, vector<1x1x2x96xf32>
    %530 = vector.shape_cast %529 : vector<1x1x2x96xf32> to vector<2x96xf32>
    %cst_208 = arith.constant dense<0.000000e+00> : vector<2x96xf32>
    %531 = tpu.matmul %487, %3, %cst_208 {dimension_numbers = #tpu.dot_dimension_numbers<[1], [0], [0], [1], [0, 0, 1, 1], [], []>} : vector<2x32xf32>, vector<32x96xf32>, vector<2x96xf32> -> vector<2x96xf32>
    %cst_209 = arith.constant dense<0.000000e+00> : vector<2x96xf32>
    %532 = tpu.matmul %515, %4, %cst_209 {dimension_numbers = #tpu.dot_dimension_numbers<[1], [0], [0], [1], [0, 0, 1, 1], [], []>} : vector<2x32xf32>, vector<32x96xf32>, vector<2x96xf32> -> vector<2x96xf32>
    %533 = arith.addf %527, %531 : vector<2x96xf32>
    %534 = vector.extract_strided_slice %533 {offsets = [0, 0], sizes = [2, 32], strides = [1, 1]} : vector<2x96xf32> to vector<2x32xf32>
    %cst_210 = arith.constant 5.000000e-01 : f32
    %535 = vector.broadcast %cst_210 : f32 to vector<2x32xf32>
    %536 = arith.mulf %535, %534 : vector<2x32xf32>
    %537 = math.tanh %536 : vector<2x32xf32>
    %cst_211 = arith.constant 1.000000e+00 : f32
    %538 = vector.broadcast %cst_211 : f32 to vector<2x32xf32>
    %539 = arith.addf %537, %538 : vector<2x32xf32>
    %cst_212 = arith.constant 5.000000e-01 : f32
    %540 = vector.broadcast %cst_212 : f32 to vector<2x32xf32>
    %541 = arith.mulf %540, %539 : vector<2x32xf32>
    %542 = vector.extract_strided_slice %533 {offsets = [0, 32], sizes = [2, 32], strides = [1, 1]} : vector<2x96xf32> to vector<2x32xf32>
    %cst_213 = arith.constant 5.000000e-01 : f32
    %543 = vector.broadcast %cst_213 : f32 to vector<2x32xf32>
    %544 = arith.mulf %543, %542 : vector<2x32xf32>
    %545 = math.tanh %544 : vector<2x32xf32>
    %cst_214 = arith.constant 1.000000e+00 : f32
    %546 = vector.broadcast %cst_214 : f32 to vector<2x32xf32>
    %547 = arith.addf %545, %546 : vector<2x32xf32>
    %cst_215 = arith.constant 5.000000e-01 : f32
    %548 = vector.broadcast %cst_215 : f32 to vector<2x32xf32>
    %549 = arith.mulf %548, %547 : vector<2x32xf32>
    %550 = vector.extract_strided_slice %527 {offsets = [0, 64], sizes = [2, 32], strides = [1, 1]} : vector<2x96xf32> to vector<2x32xf32>
    %551 = vector.extract_strided_slice %531 {offsets = [0, 64], sizes = [2, 32], strides = [1, 1]} : vector<2x96xf32> to vector<2x32xf32>
    %552 = arith.addf %551, %7 : vector<2x32xf32>
    %553 = arith.mulf %541, %552 : vector<2x32xf32>
    %554 = arith.addf %550, %553 : vector<2x32xf32>
    %555 = math.tanh %554 : vector<2x32xf32>
    %cst_216 = arith.constant 1.000000e+00 : f32
    %556 = vector.broadcast %cst_216 : f32 to vector<2x32xf32>
    %557 = arith.subf %556, %549 : vector<2x32xf32>
    %558 = arith.mulf %557, %555 : vector<2x32xf32>
    %559 = arith.mulf %549, %487 : vector<2x32xf32>
    %560 = arith.addf %558, %559 : vector<2x32xf32>
    %561 = arith.addf %530, %532 : vector<2x96xf32>
    %562 = vector.extract_strided_slice %561 {offsets = [0, 0], sizes = [2, 32], strides = [1, 1]} : vector<2x96xf32> to vector<2x32xf32>
    %cst_217 = arith.constant 5.000000e-01 : f32
    %563 = vector.broadcast %cst_217 : f32 to vector<2x32xf32>
    %564 = arith.mulf %563, %562 : vector<2x32xf32>
    %565 = math.tanh %564 : vector<2x32xf32>
    %cst_218 = arith.constant 1.000000e+00 : f32
    %566 = vector.broadcast %cst_218 : f32 to vector<2x32xf32>
    %567 = arith.addf %565, %566 : vector<2x32xf32>
    %cst_219 = arith.constant 5.000000e-01 : f32
    %568 = vector.broadcast %cst_219 : f32 to vector<2x32xf32>
    %569 = arith.mulf %568, %567 : vector<2x32xf32>
    %570 = vector.extract_strided_slice %561 {offsets = [0, 32], sizes = [2, 32], strides = [1, 1]} : vector<2x96xf32> to vector<2x32xf32>
    %cst_220 = arith.constant 5.000000e-01 : f32
    %571 = vector.broadcast %cst_220 : f32 to vector<2x32xf32>
    %572 = arith.mulf %571, %570 : vector<2x32xf32>
    %573 = math.tanh %572 : vector<2x32xf32>
    %cst_221 = arith.constant 1.000000e+00 : f32
    %574 = vector.broadcast %cst_221 : f32 to vector<2x32xf32>
    %575 = arith.addf %573, %574 : vector<2x32xf32>
    %cst_222 = arith.constant 5.000000e-01 : f32
    %576 = vector.broadcast %cst_222 : f32 to vector<2x32xf32>
    %577 = arith.mulf %576, %575 : vector<2x32xf32>
    %578 = vector.extract_strided_slice %530 {offsets = [0, 64], sizes = [2, 32], strides = [1, 1]} : vector<2x96xf32> to vector<2x32xf32>
    %579 = vector.extract_strided_slice %532 {offsets = [0, 64], sizes = [2, 32], strides = [1, 1]} : vector<2x96xf32> to vector<2x32xf32>
    %580 = arith.addf %579, %10 : vector<2x32xf32>
    %581 = arith.mulf %569, %580 : vector<2x32xf32>
    %582 = arith.addf %578, %581 : vector<2x32xf32>
    %583 = math.tanh %582 : vector<2x32xf32>
    %cst_223 = arith.constant 1.000000e+00 : f32
    %584 = vector.broadcast %cst_223 : f32 to vector<2x32xf32>
    %585 = arith.subf %584, %577 : vector<2x32xf32>
    %586 = arith.mulf %585, %583 : vector<2x32xf32>
    %587 = arith.mulf %577, %515 : vector<2x32xf32>
    %588 = arith.addf %586, %587 : vector<2x32xf32>
    %589 = arith.index_cast %c7_i32_200 : i32 to index
    %c0_224 = arith.constant 0 : index
    %c0_225 = arith.constant 0 : index
    %590 = vector.load %arg7[%589, %c0_224, %c0_225] : memref<8x2x32xf32, #tpu.memory_space<vmem>>, vector<1x2x32xf32>
    %591 = vector.shape_cast %590 : vector<1x2x32xf32> to vector<2x32xf32>
    %592 = vector.shape_cast %560 : vector<2x32xf32> to vector<1x2x32xf32>
    tpu.vector_store %arg7[%589, %c0_224, %c0_225], %592 {strides = array<i32>} : memref<8x2x32xf32, #tpu.memory_space<vmem>>, vector<1x2x32xf32>,
    %593 = arith.index_cast %524 : i32 to index
    %c0_226 = arith.constant 0 : index
    %c0_227 = arith.constant 0 : index
    %594 = vector.load %arg8[%593, %c0_226, %c0_227] : memref<8x2x32xf32, #tpu.memory_space<vmem>>, vector<1x2x32xf32>
    %595 = vector.shape_cast %594 : vector<1x2x32xf32> to vector<2x32xf32>
    %596 = vector.shape_cast %588 : vector<2x32xf32> to vector<1x2x32xf32>
    tpu.vector_store %arg8[%593, %c0_226, %c0_227], %596 {strides = array<i32>} : memref<8x2x32xf32, #tpu.memory_space<vmem>>, vector<1x2x32xf32>,
    %c8_i32 = arith.constant 8 : i32
    %c0_228 = arith.constant 0 : index
    %c0_229 = arith.constant 0 : index
    %597 = vector.load %arg9[%c0_228, %c0_229] : memref<2x32xf32, #tpu.memory_space<vmem>>, vector<2x32xf32>
    tpu.vector_store %arg9[%c0_228, %c0_229], %560 {strides = array<i32>} : memref<2x32xf32, #tpu.memory_space<vmem>>, vector<2x32xf32>,
    %c0_230 = arith.constant 0 : index
    %c0_231 = arith.constant 0 : index
    %598 = vector.load %arg10[%c0_230, %c0_231] : memref<2x32xf32, #tpu.memory_space<vmem>>, vector<2x32xf32>
    tpu.vector_store %arg10[%c0_230, %c0_231], %588 {strides = array<i32>} : memref<2x32xf32, #tpu.memory_space<vmem>>, vector<2x32xf32>,
    return
  }
  func.func @transform_0(%arg0: i32) -> (i32, i32, i32, i32) {
    %c0_i32 = arith.constant 0 : i32
    %c0_i32_0 = arith.constant 0 : i32
    %c0_i32_1 = arith.constant 0 : i32
    %c0_i32_2 = arith.constant 0 : i32
    return %c0_i32, %arg0, %c0_i32_0, %c0_i32_1 : i32, i32, i32, i32
  }
  func.func @transform_1(%arg0: i32) -> (i32, i32, i32, i32) {
    %c0_i32 = arith.constant 0 : i32
    %0 = arith.subi %c0_i32, %arg0 : i32
    %c1_i32 = arith.constant 1 : i32
    %c0_i32_0 = arith.constant 0 : i32
    %c0_i32_1 = arith.constant 0 : i32
    %c0_i32_2 = arith.constant 0 : i32
    return %c1_i32, %0, %c0_i32_0, %c0_i32_1 : i32, i32, i32, i32
  }
  func.func @transform_2(%arg0: i32) -> (i32, i32) {
    %c0_i32 = arith.constant 0 : i32
    %c0_i32_0 = arith.constant 0 : i32
    %c0_i32_1 = arith.constant 0 : i32
    return %c0_i32, %c0_i32_0 : i32, i32
  }
  func.func @transform_3(%arg0: i32) -> (i32, i32) {
    %c0_i32 = arith.constant 0 : i32
    %c0_i32_0 = arith.constant 0 : i32
    %c0_i32_1 = arith.constant 0 : i32
    return %c0_i32, %c0_i32_0 : i32, i32
  }
  func.func @transform_4(%arg0: i32) -> (i32, i32) {
    %c0_i32 = arith.constant 0 : i32
    %c0_i32_0 = arith.constant 0 : i32
    %c0_i32_1 = arith.constant 0 : i32
    return %c0_i32, %c0_i32_0 : i32, i32
  }
  func.func @transform_5(%arg0: i32) -> (i32, i32) {
    %c0_i32 = arith.constant 0 : i32
    %c0_i32_0 = arith.constant 0 : i32
    %c0_i32_1 = arith.constant 0 : i32
    return %c0_i32, %c0_i32_0 : i32, i32
  }
  func.func @transform_6(%arg0: i32) -> (i32, i32, i32) {
    %c0_i32 = arith.constant 0 : i32
    %c0_i32_0 = arith.constant 0 : i32
    %c0_i32_1 = arith.constant 0 : i32
    return %arg0, %c0_i32, %c0_i32_0 : i32, i32, i32
  }
  func.func @transform_7(%arg0: i32) -> (i32, i32, i32) {
    %c0_i32 = arith.constant 0 : i32
    %0 = arith.subi %c0_i32, %arg0 : i32
    %c0_i32_0 = arith.constant 0 : i32
    %c0_i32_1 = arith.constant 0 : i32
    %c0_i32_2 = arith.constant 0 : i32
    return %0, %c0_i32_0, %c0_i32_1 : i32, i32, i32
  }
}

</mosaic_0001>

<llo_original>
// kernel: encoder_forward.1
$region0: #{encoder_forward.1}
  #allocation0 [shape = 'u32[]', space=smem, size = 0x4, offset = 0x4, fixed_abs, tag = 'smem constant byte address 0x4 - core index']
  #allocation1 [shape = 'u32[144,128]{1,0:T(1,128)}', space=vmem, size = 0x12000, scoped, tag = 'internal scratch']
  #allocation2 [shape = 'f32[2,32]{1,0:T(2,128)}', space=vmem, size = 0x400, scoped, tag = 'scratch operand']
  #allocation3 [shape = 'f32[2,32]{1,0:T(2,128)}', space=vmem, size = 0x400, scoped, tag = 'scratch operand']
  %s0 = inlined_call_operand.vmem [shape: f32[2,8,2,96], index: 0, kind: input, shape index: {}, may-alias: {0,1}]
  %s1 = inlined_call_operand.vmem [shape: f32[2,8,2,96], index: 1, kind: input, shape index: {}, may-alias: {0,1}]
  %s2 = inlined_call_operand.vmem [shape: f32[32,96], index: 2, kind: input, shape index: {}]
  %s3 = inlined_call_operand.vmem [shape: f32[32,96], index: 3, kind: input, shape index: {}]
  %s4 = inlined_call_operand.vmem [shape: f32[1,32], index: 4, kind: input, shape index: {}]
  %s5 = inlined_call_operand.vmem [shape: f32[1,32], index: 5, kind: input, shape index: {}]
  %s6 = inlined_call_operand.vmem [shape: f32[8,2,32], index: 6, kind: output, shape index: {0}]
  %s7 = inlined_call_operand.vmem [shape: f32[8,2,32], index: 7, kind: output, shape index: {1}]
  %8 = xla_tuple %s6, %s7
  %s9 = sld [smem:[#allocation0]]
  $region46: #{encoder_forward.1} parent=0
    _
  %s11 = ssub.s32 1, %s9
  %s12 = scalar_select 0, %s11, %s9
  // Predicated region
  $region2: #{encoder_forward.1} parent=0 // pred_check
    _
  $region3: #{encoder_forward.1} parent=0 // pred_check_branch
    %14 = sbr.rel (0) target = $region5
  $region4: #{encoder_forward.1} parent=0 // pred_region
    _
  $region5: #{encoder_forward.1} parent=0 // pred_fallthru
    _
  // Predicated region
  $region6: #{encoder_forward.1} parent=0 // pred_check
    _
  $region7: #{encoder_forward.1} parent=0 // pred_check_branch
    %16 = sbr.rel (0) target = $region9
  $region8: #{encoder_forward.1} parent=0 // pred_region
    %s17 = ssub.s32 0, 0
    %s18 = smul.u32 8, %s17
    %p19 = scmp.lt.s32.totalorder %s18, 7
    %s20 = scalar_select %p19, %s18, 7
    %s21 = sadd.s32 %s20, 8
    %s22 = smul.addr %s21, 2
    %s23 = scalar_lea.vmem %s1, %s22
    %s24 = ssub.s32 0, 0
    %s25 = smul.u32 8, %s24
  $region9: #{encoder_forward.1} parent=0 // pred_fallthru
    _
  // Predicated region
  $region10: #{encoder_forward.1} parent=0 // pred_check
    _
  $region11: #{encoder_forward.1} parent=0 // pred_check_branch
    %27 = sbr.rel (0) target = $region13
  $region12: #{encoder_forward.1} parent=0 // pred_region
    _
  $region13: #{encoder_forward.1} parent=0 // pred_fallthru
    _
  // Predicated region
  $region14: #{encoder_forward.1} parent=0 // pred_check
    _
  $region15: #{encoder_forward.1} parent=0 // pred_check_branch
    %29 = sbr.rel (0) target = $region17
  $region16: #{encoder_forward.1} parent=0 // pred_region
    _
  $region17: #{encoder_forward.1} parent=0 // pred_fallthru
    _
  // Predicated region
  $region18: #{encoder_forward.1} parent=0 // pred_check
    _
  $region19: #{encoder_forward.1} parent=0 // pred_check_branch
    %31 = sbr.rel (0) target = $region21
  $region20: #{encoder_forward.1} parent=0 // pred_region
    _
  $region21: #{encoder_forward.1} parent=0 // pred_fallthru
    _
  // Predicated region
  $region22: #{encoder_forward.1} parent=0 // pred_check
    _
  $region23: #{encoder_forward.1} parent=0 // pred_check_branch
    %33 = sbr.rel (0) target = $region25
  $region24: #{encoder_forward.1} parent=0 // pred_region
    _
  $region25: #{encoder_forward.1} parent=0 // pred_fallthru
    _
  %s34 = ssub.s32 0, 0
  %s35 = smul.u32 8, %s34
  %p36 = scmp.lt.s32.totalorder %s35, 7
  %s37 = scalar_select %p36, %s35, 7
  %s38 = sadd.s32 %s37, 8
  %s39 = smul.addr %s38, 2
  %s40 = scalar_lea.vmem %s1, %s39
  %s41 = ssub.s32 0, 0
  %s42 = smul.u32 8, %s41
  %p43 = scmp.lt.s32.totalorder %s42, 7
  %s44 = scalar_select %p43, %s42, 7
  %s45 = smul.addr %s44, 2
  %s46 = scalar_lea.vmem %s7, %s45
  %s47 = ssub.s32 0, 0
  %s48 = smul.u32 8, %s47
  %p49 = scmp.lt.s32.totalorder %s48, 7
  %s50 = scalar_select %p49, %s48, 7
  %s51 = sadd.s32 %s50, 8
  %s52 = smul.addr %s51, 2
  %s53 = scalar_lea.vmem %s1, %s52
  %s54 = ssub.s32 0, 0
  %s55 = smul.u32 8, %s54
  %s56 = ssub.s32 0, 0
  %s57 = smul.u32 8, %s56
  %p58 = scmp.lt.s32.totalorder %s57, 7
  %s59 = scalar_select %p58, %s57, 7
  %s60 = smul.addr %s59, 2
  %s61 = scalar_lea.vmem %s7, %s60
  %s62 = ssub.s32 0, 0
  %s63 = smul.u32 8, %s62
  %p64 = scmp.eq.s32.totalorder 0, 0
  // Predicated region
  $region26: #{encoder_forward.1} parent=0 // pred_check
    %p65 = pneg %p64
  $region27: #{encoder_forward.1} parent=0 // pred_check_branch
    %67 = sbr.rel (%p65) target = $region29
  $region28: #{encoder_forward.1} parent=0 // pred_region
    %vm68 = vcmask 254976
    %69 = vst.msk [vmem:[#allocation2] sm:$0x3] %vm68, 0.0
    %70 = vst.msk [vmem:[#allocation3] sm:$0x3] %vm68, 0.0
  $region29: #{encoder_forward.1} parent=0 // pred_fallthru
    _
  %v71 = vld [vmem:[%s2] sm:$0xff]
  %v72 = vld [vmem:[%s2 + $0x8] sm:$0xff]
  %v73 = vld [vmem:[%s2 + $0x10] sm:$0xff]
  %v74 = vld [vmem:[%s2 + $0x18] sm:$0xff]
  %v75 = vld [vmem:[%s3] sm:$0xff]
  %v76 = vld [vmem:[%s3 + $0x8] sm:$0xff]
  %v77 = vld [vmem:[%s3 + $0x10] sm:$0xff]
  %v78 = vld [vmem:[%s3 + $0x18] sm:$0xff]
  %v79 = vld [vmem:[%s4] sm:$0x1]
  %v81 = vlaneseq
  %v82 = vshrl.u32 %v81, 7
  %v83 = vsub.s32 0, %v82
  %v84 = vrot.slane %v79, %v83
  %v85 = vld [vmem:[%s5] sm:$0x1]
  %v87 = vlaneseq
  %v88 = vshrl.u32 %v87, 7
  %v89 = vsub.s32 0, %v88
  %v90 = vrot.slane %v85, %v89
  %v91 = vld [vmem:[#allocation2] sm:$0x3]
  %v92 = vld [vmem:[#allocation3] sm:$0x3]
  %v93 = vld [vmem:[%s0] sm:$0x3]
  %s94 = scalar_lea.vmem %s53, 14
  %v95 = vld [vmem:[%s94] sm:$0x3]
  %vm96 = vcmask 261120
  %v98 = vsel %vm96, %v91, 0
  %100 = vmatprep.subr.mxu0 0.0
  %101 = vmatpush1.msra.mxu0 0.0
  %102 = vmatprep.subr.mxu0 0.0
  %103 = vmatpush1.msra.mxu0 0.0
  %104 = vmatprep.subr.mxu0 0.0
  %105 = vmatpush1.msra.mxu0 0.0
  %106 = vmatprep.subr.mxu0 0.0
  %107 = vmatpush1.msra.mxu0 0.0
  %108 = vmatprep.subr.mxu0 0.0
  %109 = vmatpush1.msra.mxu0 0.0
  %110 = vmatprep.subr.mxu0 0.0
  %111 = vmatpush1.msra.mxu0 0.0
  %112 = vmatprep.subr.mxu0 0.0
  %113 = vmatpush1.msra.mxu0 0.0
  %114 = vmatprep.subr.mxu0 0.0
  %115 = vmatpush1.msra.mxu0 0.0
  %116 = vmatprep.subr.mxu0 0.0
  %117 = vmatpush1.msra.mxu0 0.0
  %118 = vmatprep.subr.mxu0 0.0
  %119 = vmatpush1.msra.mxu0 0.0
  %120 = vmatprep.subr.mxu0 0.0
  %121 = vmatpush1.msra.mxu0 0.0
  %122 = vmatprep.subr.mxu0 0.0
  %123 = vmatpush1.msra.mxu0 0.0
  %124 = vmatprep.subr.mxu0 0.0
  %125 = vmatpush1.msra.mxu0 %v74
  %126 = vmatprep.subr.mxu0 0.0
  %127 = vmatpush1.msra.mxu0 %v73
  %128 = vmatprep.subr.mxu0 0.0
  %129 = vmatpush1.msra.mxu0 %v72
  %130 = vmatprep.subr.mxu0 0.0
  %131 = vmatpush1.msra.mxu0 %v71
  %132 = vmatprep.subr.mxu0 0.0
  %133 = vmatpush2.msra.mxu0 0.0
  %134 = vmatprep.subr.mxu0 0.0
  %135 = vmatpush2.msra.mxu0 0.0
  %136 = vmatprep.subr.mxu0 0.0
  %137 = vmatpush2.msra.mxu0 0.0
  %138 = vmatprep.subr.mxu0 0.0
  %139 = vmatpush2.msra.mxu0 0.0
  %140 = vmatprep.subr.mxu0 0.0
  %141 = vmatpush2.msra.mxu0 0.0
  %142 = vmatprep.subr.mxu0 0.0
  %143 = vmatpush2.msra.mxu0 0.0
  %144 = vmatprep.subr.mxu0 0.0
  %145 = vmatpush2.msra.mxu0 0.0
  %146 = vmatprep.subr.mxu0 0.0
  %147 = vmatpush2.msra.mxu0 0.0
  %148 = vmatprep.subr.mxu0 0.0
  %149 = vmatpush2.msra.mxu0 0.0
  %150 = vmatprep.subr.mxu0 0.0
  %151 = vmatpush2.msra.mxu0 0.0
  %152 = vmatprep.subr.mxu0 0.0
  %153 = vmatpush2.msra.mxu0 0.0
  %154 = vmatprep.subr.mxu0 0.0
  %155 = vmatpush2.msra.mxu0 0.0
  %156 = vmatprep.subr.mxu0 0.0
  %157 = vmatpush2.msra.mxu0 0.0
  %158 = vmatprep.subr.mxu0 0.0
  %159 = vmatpush2.msra.mxu0 0.0
  %160 = vmatprep.subr.mxu0 0.0
  %161 = vmatpush2.msra.mxu0 0.0
  %162 = vmatprep.subr.mxu0 0.0
  %163 = vmatpush2.msra.mxu0 0.0
  %164 = vmatprep.mubr.f32.mxu0 0.0
  %165 = vmatmul.mubr.f32.gmra.mxu0 %v98
  %v166 = vpop.f32.mrf.mxu0
  %v167 = vadd.f32 0.0, %v166
  %v168 = vpop.f32.mrf.mxu0
  %169 = vdwg.mxu0
  %v171 = vsel %vm96, %v92, 0
  %173 = vmatprep.subr.mxu0 0.0
  %174 = vmatpush1.msra.mxu0 0.0
  %175 = vmatprep.subr.mxu0 0.0
  %176 = vmatpush1.msra.mxu0 0.0
  %177 = vmatprep.subr.mxu0 0.0
  %178 = vmatpush1.msra.mxu0 0.0
  %179 = vmatprep.subr.mxu0 0.0
  %180 = vmatpush1.msra.mxu0 0.0
  %181 = vmatprep.subr.mxu0 0.0
  %182 = vmatpush1.msra.mxu0 0.0
  %183 = vmatprep.subr.mxu0 0.0
  %184 = vmatpush1.msra.mxu0 0.0
  %185 = vmatprep.subr.mxu0 0.0
  %186 = vmatpush1.msra.mxu0 0.0
  %187 = vmatprep.subr.mxu0 0.0
  %188 = vmatpush1.msra.mxu0 0.0
  %189 = vmatprep.subr.mxu0 0.0
  %190 = vmatpush1.msra.mxu0 0.0
  %191 = vmatprep.subr.mxu0 0.0
  %192 = vmatpush1.msra.mxu0 0.0
  %193 = vmatprep.subr.mxu0 0.0
  %194 = vmatpush1.msra.mxu0 0.0
  %195 = vmatprep.subr.mxu0 0.0
  %196 = vmatpush1.msra.mxu0 0.0
  %197 = vmatprep.subr.mxu0 0.0
  %198 = vmatpush1.msra.mxu0 %v78
  %199 = vmatprep.subr.mxu0 0.0
  %200 = vmatpush1.msra.mxu0 %v77
  %201 = vmatprep.subr.mxu0 0.0
  %202 = vmatpush1.msra.mxu0 %v76
  %203 = vmatprep.subr.mxu0 0.0
  %204 = vmatpush1.msra.mxu0 %v75
  %205 = vmatprep.subr.mxu0 0.0
  %206 = vmatpush2.msra.mxu0 0.0
  %207 = vmatprep.subr.mxu0 0.0
  %208 = vmatpush2.msra.mxu0 0.0
  %209 = vmatprep.subr.mxu0 0.0
  %210 = vmatpush2.msra.mxu0 0.0
  %211 = vmatprep.subr.mxu0 0.0
  %212 = vmatpush2.msra.mxu0 0.0
  %213 = vmatprep.subr.mxu0 0.0
  %214 = vmatpush2.msra.mxu0 0.0
  %215 = vmatprep.subr.mxu0 0.0
  %216 = vmatpush2.msra.mxu0 0.0
  %217 = vmatprep.subr.mxu0 0.0
  %218 = vmatpush2.msra.mxu0 0.0
  %219 = vmatprep.subr.mxu0 0.0
  %220 = vmatpush2.msra.mxu0 0.0
  %221 = vmatprep.subr.mxu0 0.0
  %222 = vmatpush2.msra.mxu0 0.0
  %223 = vmatprep.subr.mxu0 0.0
  %224 = vmatpush2.msra.mxu0 0.0
  %225 = vmatprep.subr.mxu0 0.0
  %226 = vmatpush2.msra.mxu0 0.0
  %227 = vmatprep.subr.mxu0 0.0
  %228 = vmatpush2.msra.mxu0 0.0
  %229 = vmatprep.subr.mxu0 0.0
  %230 = vmatpush2.msra.mxu0 0.0
  %231 = vmatprep.subr.mxu0 0.0
  %232 = vmatpush2.msra.mxu0 0.0
  %233 = vmatprep.subr.mxu0 0.0
  %234 = vmatpush2.msra.mxu0 0.0
  %235 = vmatprep.subr.mxu0 0.0
  %236 = vmatpush2.msra.mxu0 0.0
  %237 = vmatprep.mubr.f32.mxu0 0.0
  %238 = vmatmul.mubr.f32.gmra.mxu0 %v171
  %v239 = vpop.f32.mrf.mxu0
  %v240 = vadd.f32 0.0, %v239
  %v241 = vpop.f32.mrf.mxu0
  %242 = vdwg.mxu0
  %v243 = vadd.f32 %v93, %v167
  %v244 = vmul.f32 %v243, 0.5
  %v245 = vtanh.pop %v244
  %v246 = vadd.f32 %v245, 1.0
  %v247 = vmul.f32 %v246, 0.5
  %248 = vrot.lane.b32.xlu0 %v84, 64
  %v249 = vpop.permute.xlu0 %248
  %v251 = vadd.f32 %v167, %v249
  %253 = vrot.lane.b32.xlu0 %v251, 64
  %v254 = vpop.permute.xlu0 %253
  %v256 = vmul.f32 %v247, %v254
  %258 = vrot.lane.b32.xlu0 %v256, 64
  %v259 = vpop.permute.xlu0 %258
  %v261 = vadd.f32 %v93, %v259
  %v262 = vtanh.pop %v261
  %v263 = vsub.f32 1.0, %v247
  %265 = vrot.lane.b32.xlu0 %v262, 96
  %v266 = vpop.permute.xlu0 %265
  %v268 = vmul.f32 %v263, %v266
  %269 = vrot.lane.b32.xlu0 %v91, 32
  %v270 = vpop.permute.xlu0 %269
  %v272 = vmul.f32 %v247, %v270
  %v273 = vadd.f32 %v268, %v272
  %v274 = vadd.f32 %v95, %v240
  %v275 = vmul.f32 %v274, 0.5
  %v276 = vtanh.pop %v275
  %v277 = vadd.f32 %v276, 1.0
  %v278 = vmul.f32 %v277, 0.5
  %279 = vrot.lane.b32.xlu0 %v90, 64
  %v280 = vpop.permute.xlu0 %279
  %v282 = vadd.f32 %v240, %v280
  %284 = vrot.lane.b32.xlu0 %v282, 64
  %v285 = vpop.permute.xlu0 %284
  %v287 = vmul.f32 %v278, %v285
  %289 = vrot.lane.b32.xlu0 %v287, 64
  %v290 = vpop.permute.xlu0 %289
  %v292 = vadd.f32 %v95, %v290
  %v293 = vtanh.pop %v292
  %v294 = vsub.f32 1.0, %v278
  %296 = vrot.lane.b32.xlu0 %v293, 96
  %v297 = vpop.permute.xlu0 %296
  %v299 = vmul.f32 %v294, %v297
  %300 = vrot.lane.b32.xlu0 %v92, 32
  %v301 = vpop.permute.xlu0 %300
  %v303 = vmul.f32 %v278, %v301
  %v304 = vadd.f32 %v299, %v303
  %306 = vrot.lane.b32.xlu0 %v273, 96
  %v307 = vpop.permute.xlu0 %306
  %vm309 = vcmask 254976
  %310 = vst.msk [vmem:[%s6] sm:$0x3] %vm309, %v307
  %312 = vrot.lane.b32.xlu0 %v304, 96
  %v313 = vpop.permute.xlu0 %312
  %s315 = scalar_lea.vmem %s61, 14
  %316 = vst.msk [vmem:[%s315] sm:$0x3] %vm309, %v313
  %s317 = scalar_lea.vmem %s0, 2
  %v318 = vld [vmem:[%s317] sm:$0x3]
  %s319 = scalar_lea.vmem %s53, 12
  %v320 = vld [vmem:[%s319] sm:$0x3]
  %v321 = vsel %vm96, %v307, 0
  %323 = vmatprep.subr.mxu0 0.0
  %324 = vmatpush1.msra.mxu0 0.0
  %325 = vmatprep.subr.mxu0 0.0
  %326 = vmatpush1.msra.mxu0 0.0
  %327 = vmatprep.subr.mxu0 0.0
  %328 = vmatpush1.msra.mxu0 0.0
  %329 = vmatprep.subr.mxu0 0.0
  %330 = vmatpush1.msra.mxu0 0.0
  %331 = vmatprep.subr.mxu0 0.0
  %332 = vmatpush1.msra.mxu0 0.0
  %333 = vmatprep.subr.mxu0 0.0
  %334 = vmatpush1.msra.mxu0 0.0
  %335 = vmatprep.subr.mxu0 0.0
  %336 = vmatpush1.msra.mxu0 0.0
  %337 = vmatprep.subr.mxu0 0.0
  %338 = vmatpush1.msra.mxu0 0.0
  %339 = vmatprep.subr.mxu0 0.0
  %340 = vmatpush1.msra.mxu0 0.0
  %341 = vmatprep.subr.mxu0 0.0
  %342 = vmatpush1.msra.mxu0 0.0
  %343 = vmatprep.subr.mxu0 0.0
  %344 = vmatpush1.msra.mxu0 0.0
  %345 = vmatprep.subr.mxu0 0.0
  %346 = vmatpush1.msra.mxu0 0.0
  %347 = vmatprep.subr.mxu0 0.0
  %348 = vmatpush1.msra.mxu0 %v74
  %349 = vmatprep.subr.mxu0 0.0
  %350 = vmatpush1.msra.mxu0 %v73
  %351 = vmatprep.subr.mxu0 0.0
  %352 = vmatpush1.msra.mxu0 %v72
  %353 = vmatprep.subr.mxu0 0.0
  %354 = vmatpush1.msra.mxu0 %v71
  %355 = vmatprep.subr.mxu0 0.0
  %356 = vmatpush2.msra.mxu0 0.0
  %357 = vmatprep.subr.mxu0 0.0
  %358 = vmatpush2.msra.mxu0 0.0
  %359 = vmatprep.subr.mxu0 0.0
  %360 = vmatpush2.msra.mxu0 0.0
  %361 = vmatprep.subr.mxu0 0.0
  %362 = vmatpush2.msra.mxu0 0.0
  %363 = vmatprep.subr.mxu0 0.0
  %364 = vmatpush2.msra.mxu0 0.0
  %365 = vmatprep.subr.mxu0 0.0
  %366 = vmatpush2.msra.mxu0 0.0
  %367 = vmatprep.subr.mxu0 0.0
  %368 = vmatpush2.msra.mxu0 0.0
  %369 = vmatprep.subr.mxu0 0.0
  %370 = vmatpush2.msra.mxu0 0.0
  %371 = vmatprep.subr.mxu0 0.0
  %372 = vmatpush2.msra.mxu0 0.0
  %373 = vmatprep.subr.mxu0 0.0
  %374 = vmatpush2.msra.mxu0 0.0
  %375 = vmatprep.subr.mxu0 0.0
  %376 = vmatpush2.msra.mxu0 0.0
  %377 = vmatprep.subr.mxu0 0.0
  %378 = vmatpush2.msra.mxu0 0.0
  %379 = vmatprep.subr.mxu0 0.0
  %380 = vmatpush2.msra.mxu0 0.0
  %381 = vmatprep.subr.mxu0 0.0
  %382 = vmatpush2.msra.mxu0 0.0
  %383 = vmatprep.subr.mxu0 0.0
  %384 = vmatpush2.msra.mxu0 0.0
  %385 = vmatprep.subr.mxu0 0.0
  %386 = vmatpush2.msra.mxu0 0.0
  %387 = vmatprep.mubr.f32.mxu0 0.0
  %388 = vmatmul.mubr.f32.gmra.mxu0 %v321
  %v389 = vpop.f32.mrf.mxu0
  %v390 = vadd.f32 0.0, %v389
  %v391 = vpop.f32.mrf.mxu0
  %392 = vdwg.mxu0
  %v393 = vsel %vm96, %v313, 0
  %395 = vmatprep.subr.mxu0 0.0
  %396 = vmatpush1.msra.mxu0 0.0
  %397 = vmatprep.subr.mxu0 0.0
  %398 = vmatpush1.msra.mxu0 0.0
  %399 = vmatprep.subr.mxu0 0.0
  %400 = vmatpush1.msra.mxu0 0.0
  %401 = vmatprep.subr.mxu0 0.0
  %402 = vmatpush1.msra.mxu0 0.0
  %403 = vmatprep.subr.mxu0 0.0
  %404 = vmatpush1.msra.mxu0 0.0
  %405 = vmatprep.subr.mxu0 0.0
  %406 = vmatpush1.msra.mxu0 0.0
  %407 = vmatprep.subr.mxu0 0.0
  %408 = vmatpush1.msra.mxu0 0.0
  %409 = vmatprep.subr.mxu0 0.0
  %410 = vmatpush1.msra.mxu0 0.0
  %411 = vmatprep.subr.mxu0 0.0
  %412 = vmatpush1.msra.mxu0 0.0
  %413 = vmatprep.subr.mxu0 0.0
  %414 = vmatpush1.msra.mxu0 0.0
  %415 = vmatprep.subr.mxu0 0.0
  %416 = vmatpush1.msra.mxu0 0.0
  %417 = vmatprep.subr.mxu0 0.0
  %418 = vmatpush1.msra.mxu0 0.0
  %419 = vmatprep.subr.mxu0 0.0
  %420 = vmatpush1.msra.mxu0 %v78
  %421 = vmatprep.subr.mxu0 0.0
  %422 = vmatpush1.msra.mxu0 %v77
  %423 = vmatprep.subr.mxu0 0.0
  %424 = vmatpush1.msra.mxu0 %v76
  %425 = vmatprep.subr.mxu0 0.0
  %426 = vmatpush1.msra.mxu0 %v75
  %427 = vmatprep.subr.mxu0 0.0
  %428 = vmatpush2.msra.mxu0 0.0
  %429 = vmatprep.subr.mxu0 0.0
  %430 = vmatpush2.msra.mxu0 0.0
  %431 = vmatprep.subr.mxu0 0.0
  %432 = vmatpush2.msra.mxu0 0.0
  %433 = vmatprep.subr.mxu0 0.0
  %434 = vmatpush2.msra.mxu0 0.0
  %435 = vmatprep.subr.mxu0 0.0
  %436 = vmatpush2.msra.mxu0 0.0
  %437 = vmatprep.subr.mxu0 0.0
  %438 = vmatpush2.msra.mxu0 0.0
  %439 = vmatprep.subr.mxu0 0.0
  %440 = vmatpush2.msra.mxu0 0.0
  %441 = vmatprep.subr.mxu0 0.0
  %442 = vmatpush2.msra.mxu0 0.0
  %443 = vmatprep.subr.mxu0 0.0
  %444 = vmatpush2.msra.mxu0 0.0
  %445 = vmatprep.subr.mxu0 0.0
  %446 = vmatpush2.msra.mxu0 0.0
  %447 = vmatprep.subr.mxu0 0.0
  %448 = vmatpush2.msra.mxu0 0.0
  %449 = vmatprep.subr.mxu0 0.0
  %450 = vmatpush2.msra.mxu0 0.0
  %451 = vmatprep.subr.mxu0 0.0
  %452 = vmatpush2.msra.mxu0 0.0
  %453 = vmatprep.subr.mxu0 0.0
  %454 = vmatpush2.msra.mxu0 0.0
  %455 = vmatprep.subr.mxu0 0.0
  %456 = vmatpush2.msra.mxu0 0.0
  %457 = vmatprep.subr.mxu0 0.0
  %458 = vmatpush2.msra.mxu0 0.0
  %459 = vmatprep.mubr.f32.mxu0 0.0
  %460 = vmatmul.mubr.f32.gmra.mxu0 %v393
  %v461 = vpop.f32.mrf.mxu0
  %v462 = vadd.f32 0.0, %v461
  %v463 = vpop.f32.mrf.mxu0
  %464 = vdwg.mxu0
  %v465 = vadd.f32 %v318, %v390
  %v466 = vmul.f32 %v465, 0.5
  %v467 = vtanh.pop %v466
  %v468 = vadd.f32 %v467, 1.0
  %v469 = vmul.f32 %v468, 0.5
  %v470 = vadd.f32 %v390, %v249
  %472 = vrot.lane.b32.xlu0 %v470, 64
  %v473 = vpop.permute.xlu0 %472
  %v475 = vmul.f32 %v469, %v473
  %477 = vrot.lane.b32.xlu0 %v475, 64
  %v478 = vpop.permute.xlu0 %477
  %v480 = vadd.f32 %v318, %v478
  %v481 = vtanh.pop %v480
  %v482 = vsub.f32 1.0, %v469
  %484 = vrot.lane.b32.xlu0 %v481, 96
  %v485 = vpop.permute.xlu0 %484
  %v487 = vmul.f32 %v482, %v485
  %v488 = vmul.f32 %v469, %v273
  %v489 = vadd.f32 %v487, %v488
  %v490 = vadd.f32 %v320, %v462
  %v491 = vmul.f32 %v490, 0.5
  %v492 = vtanh.pop %v491
  %v493 = vadd.f32 %v492, 1.0
  %v494 = vmul.f32 %v493, 0.5
  %v495 = vadd.f32 %v462, %v280
  %497 = vrot.lane.b32.xlu0 %v495, 64
  %v498 = vpop.permute.xlu0 %497
  %v500 = vmul.f32 %v494, %v498
  %502 = vrot.lane.b32.xlu0 %v500, 64
  %v503 = vpop.permute.xlu0 %502
  %v505 = vadd.f32 %v320, %v503
  %v506 = vtanh.pop %v505
  %v507 = vsub.f32 1.0, %v494
  %509 = vrot.lane.b32.xlu0 %v506, 96
  %v510 = vpop.permute.xlu0 %509
  %v512 = vmul.f32 %v507, %v510
  %v513 = vmul.f32 %v494, %v304
  %v514 = vadd.f32 %v512, %v513
  %516 = vrot.lane.b32.xlu0 %v489, 96
  %v517 = vpop.permute.xlu0 %516
  %s519 = scalar_lea.vmem %s6, 2
  %520 = vst.msk [vmem:[%s519] sm:$0x3] %vm309, %v517
  %522 = vrot.lane.b32.xlu0 %v514, 96
  %v523 = vpop.permute.xlu0 %522
  %s525 = scalar_lea.vmem %s61, 12
  %526 = vst.msk [vmem:[%s525] sm:$0x3] %vm309, %v523
  %s527 = scalar_lea.vmem %s0, 4
  %v528 = vld [vmem:[%s527] sm:$0x3]
  %s529 = scalar_lea.vmem %s53, 10
  %v530 = vld [vmem:[%s529] sm:$0x3]
  %v531 = vsel %vm96, %v517, 0
  %533 = vmatprep.subr.mxu0 0.0
  %534 = vmatpush1.msra.mxu0 0.0
  %535 = vmatprep.subr.mxu0 0.0
  %536 = vmatpush1.msra.mxu0 0.0
  %537 = vmatprep.subr.mxu0 0.0
  %538 = vmatpush1.msra.mxu0 0.0
  %539 = vmatprep.subr.mxu0 0.0
  %540 = vmatpush1.msra.mxu0 0.0
  %541 = vmatprep.subr.mxu0 0.0
  %542 = vmatpush1.msra.mxu0 0.0
  %543 = vmatprep.subr.mxu0 0.0
  %544 = vmatpush1.msra.mxu0 0.0
  %545 = vmatprep.subr.mxu0 0.0
  %546 = vmatpush1.msra.mxu0 0.0
  %547 = vmatprep.subr.mxu0 0.0
  %548 = vmatpush1.msra.mxu0 0.0
  %549 = vmatprep.subr.mxu0 0.0
  %550 = vmatpush1.msra.mxu0 0.0
  %551 = vmatprep.subr.mxu0 0.0
  %552 = vmatpush1.msra.mxu0 0.0
  %553 = vmatprep.subr.mxu0 0.0
  %554 = vmatpush1.msra.mxu0 0.0
  %555 = vmatprep.subr.mxu0 0.0
  %556 = vmatpush1.msra.mxu0 0.0
  %557 = vmatprep.subr.mxu0 0.0
  %558 = vmatpush1.msra.mxu0 %v74
  %559 = vmatprep.subr.mxu0 0.0
  %560 = vmatpush1.msra.mxu0 %v73
  %561 = vmatprep.subr.mxu0 0.0
  %562 = vmatpush1.msra.mxu0 %v72
  %563 = vmatprep.subr.mxu0 0.0
  %564 = vmatpush1.msra.mxu0 %v71
  %565 = vmatprep.subr.mxu0 0.0
  %566 = vmatpush2.msra.mxu0 0.0
  %567 = vmatprep.subr.mxu0 0.0
  %568 = vmatpush2.msra.mxu0 0.0
  %569 = vmatprep.subr.mxu0 0.0
  %570 = vmatpush2.msra.mxu0 0.0
  %571 = vmatprep.subr.mxu0 0.0
  %572 = vmatpush2.msra.mxu0 0.0
  %573 = vmatprep.subr.mxu0 0.0
  %574 = vmatpush2.msra.mxu0 0.0
  %575 = vmatprep.subr.mxu0 0.0
  %576 = vmatpush2.msra.mxu0 0.0
  %577 = vmatprep.subr.mxu0 0.0
  %578 = vmatpush2.msra.mxu0 0.0
  %579 = vmatprep.subr.mxu0 0.0
  %580 = vmatpush2.msra.mxu0 0.0
  %581 = vmatprep.subr.mxu0 0.0
  %582 = vmatpush2.msra.mxu0 0.0
  %583 = vmatprep.subr.mxu0 0.0
  %584 = vmatpush2.msra.mxu0 0.0
  %585 = vmatprep.subr.mxu0 0.0
  %586 = vmatpush2.msra.mxu0 0.0
  %587 = vmatprep.subr.mxu0 0.0
  %588 = vmatpush2.msra.mxu0 0.0
  %589 = vmatprep.subr.mxu0 0.0
  %590 = vmatpush2.msra.mxu0 0.0
  %591 = vmatprep.subr.mxu0 0.0
  %592 = vmatpush2.msra.mxu0 0.0
  %593 = vmatprep.subr.mxu0 0.0
  %594 = vmatpush2.msra.mxu0 0.0
  %595 = vmatprep.subr.mxu0 0.0
  %596 = vmatpush2.msra.mxu0 0.0
  %597 = vmatprep.mubr.f32.mxu0 0.0
  %598 = vmatmul.mubr.f32.gmra.mxu0 %v531
  %v599 = vpop.f32.mrf.mxu0
  %v600 = vadd.f32 0.0, %v599
  %v601 = vpop.f32.mrf.mxu0
  %602 = vdwg.mxu0
  %v603 = vsel %vm96, %v523, 0
  %605 = vmatprep.subr.mxu0 0.0
  %606 = vmatpush1.msra.mxu0 0.0
  %607 = vmatprep.subr.mxu0 0.0
  %608 = vmatpush1.msra.mxu0 0.0
  %609 = vmatprep.subr.mxu0 0.0
  %610 = vmatpush1.msra.mxu0 0.0
  %611 = vmatprep.subr.mxu0 0.0
  %612 = vmatpush1.msra.mxu0 0.0
  %613 = vmatprep.subr.mxu0 0.0
  %614 = vmatpush1.msra.mxu0 0.0
  %615 = vmatprep.subr.mxu0 0.0
  %616 = vmatpush1.msra.mxu0 0.0
  %617 = vmatprep.subr.mxu0 0.0
  %618 = vmatpush1.msra.mxu0 0.0
  %619 = vmatprep.subr.mxu0 0.0
  %620 = vmatpush1.msra.mxu0 0.0
  %621 = vmatprep.subr.mxu0 0.0
  %622 = vmatpush1.msra.mxu0 0.0
  %623 = vmatprep.subr.mxu0 0.0
  %624 = vmatpush1.msra.mxu0 0.0
  %625 = vmatprep.subr.mxu0 0.0
  %626 = vmatpush1.msra.mxu0 0.0
  %627 = vmatprep.subr.mxu0 0.0
  %628 = vmatpush1.msra.mxu0 0.0
  %629 = vmatprep.subr.mxu0 0.0
  %630 = vmatpush1.msra.mxu0 %v78
  %631 = vmatprep.subr.mxu0 0.0
  %632 = vmatpush1.msra.mxu0 %v77
  %633 = vmatprep.subr.mxu0 0.0
  %634 = vmatpush1.msra.mxu0 %v76
  %635 = vmatprep.subr.mxu0 0.0
  %636 = vmatpush1.msra.mxu0 %v75
  %637 = vmatprep.subr.mxu0 0.0
  %638 = vmatpush2.msra.mxu0 0.0
  %639 = vmatprep.subr.mxu0 0.0
  %640 = vmatpush2.msra.mxu0 0.0
  %641 = vmatprep.subr.mxu0 0.0
  %642 = vmatpush2.msra.mxu0 0.0
  %643 = vmatprep.subr.mxu0 0.0
  %644 = vmatpush2.msra.mxu0 0.0
  %645 = vmatprep.subr.mxu0 0.0
  %646 = vmatpush2.msra.mxu0 0.0
  %647 = vmatprep.subr.mxu0 0.0
  %648 = vmatpush2.msra.mxu0 0.0
  %649 = vmatprep.subr.mxu0 0.0
  %650 = vmatpush2.msra.mxu0 0.0
  %651 = vmatprep.subr.mxu0 0.0
  %652 = vmatpush2.msra.mxu0 0.0
  %653 = vmatprep.subr.mxu0 0.0
  %654 = vmatpush2.msra.mxu0 0.0
  %655 = vmatprep.subr.mxu0 0.0
  %656 = vmatpush2.msra.mxu0 0.0
  %657 = vmatprep.subr.mxu0 0.0
  %658 = vmatpush2.msra.mxu0 0.0
  %659 = vmatprep.subr.mxu0 0.0
  %660 = vmatpush2.msra.mxu0 0.0
  %661 = vmatprep.subr.mxu0 0.0
  %662 = vmatpush2.msra.mxu0 0.0
  %663 = vmatprep.subr.mxu0 0.0
  %664 = vmatpush2.msra.mxu0 0.0
  %665 = vmatprep.subr.mxu0 0.0
  %666 = vmatpush2.msra.mxu0 0.0
  %667 = vmatprep.subr.mxu0 0.0
  %668 = vmatpush2.msra.mxu0 0.0
  %669 = vmatprep.mubr.f32.mxu0 0.0
  %670 = vmatmul.mubr.f32.gmra.mxu0 %v603
  %v671 = vpop.f32.mrf.mxu0
  %v672 = vadd.f32 0.0, %v671
  %v673 = vpop.f32.mrf.mxu0
  %674 = vdwg.mxu0
  %v675 = vadd.f32 %v528, %v600
  %v676 = vmul.f32 %v675, 0.5
  %v677 = vtanh.pop %v676
  %v678 = vadd.f32 %v677, 1.0
  %v679 = vmul.f32 %v678, 0.5
  %v680 = vadd.f32 %v600, %v249
  %682 = vrot.lane.b32.xlu0 %v680, 64
  %v683 = vpop.permute.xlu0 %682
  %v685 = vmul.f32 %v679, %v683
  %687 = vrot.lane.b32.xlu0 %v685, 64
  %v688 = vpop.permute.xlu0 %687
  %v690 = vadd.f32 %v528, %v688
  %v691 = vtanh.pop %v690
  %v692 = vsub.f32 1.0, %v679
  %694 = vrot.lane.b32.xlu0 %v691, 96
  %v695 = vpop.permute.xlu0 %694
  %v697 = vmul.f32 %v692, %v695
  %v698 = vmul.f32 %v679, %v489
  %v699 = vadd.f32 %v697, %v698
  %v700 = vadd.f32 %v530, %v672
  %v701 = vmul.f32 %v700, 0.5
  %v702 = vtanh.pop %v701
  %v703 = vadd.f32 %v702, 1.0
  %v704 = vmul.f32 %v703, 0.5
  %v705 = vadd.f32 %v672, %v280
  %707 = vrot.lane.b32.xlu0 %v705, 64
  %v708 = vpop.permute.xlu0 %707
  %v710 = vmul.f32 %v704, %v708
  %712 = vrot.lane.b32.xlu0 %v710, 64
  %v713 = vpop.permute.xlu0 %712
  %v715 = vadd.f32 %v530, %v713
  %v716 = vtanh.pop %v715
  %v717 = vsub.f32 1.0, %v704
  %719 = vrot.lane.b32.xlu0 %v716, 96
  %v720 = vpop.permute.xlu0 %719
  %v722 = vmul.f32 %v717, %v720
  %v723 = vmul.f32 %v704, %v514
  %v724 = vadd.f32 %v722, %v723
  %726 = vrot.lane.b32.xlu0 %v699, 96
  %v727 = vpop.permute.xlu0 %726
  %s729 = scalar_lea.vmem %s6, 4
  %730 = vst.msk [vmem:[%s729] sm:$0x3] %vm309, %v727
  %732 = vrot.lane.b32.xlu0 %v724, 96
  %v733 = vpop.permute.xlu0 %732
  %s735 = scalar_lea.vmem %s61, 10
  %736 = vst.msk [vmem:[%s735] sm:$0x3] %vm309, %v733
  %s737 = scalar_lea.vmem %s0, 6
  %v738 = vld [vmem:[%s737] sm:$0x3]
  %s739 = scalar_lea.vmem %s53, 8
  %v740 = vld [vmem:[%s739] sm:$0x3]
  %v741 = vsel %vm96, %v727, 0
  %743 = vmatprep.subr.mxu0 0.0
  %744 = vmatpush1.msra.mxu0 0.0
  %745 = vmatprep.subr.mxu0 0.0
  %746 = vmatpush1.msra.mxu0 0.0
  %747 = vmatprep.subr.mxu0 0.0
  %748 = vmatpush1.msra.mxu0 0.0
  %749 = vmatprep.subr.mxu0 0.0
  %750 = vmatpush1.msra.mxu0 0.0
  %751 = vmatprep.subr.mxu0 0.0
  %752 = vmatpush1.msra.mxu0 0.0
  %753 = vmatprep.subr.mxu0 0.0
  %754 = vmatpush1.msra.mxu0 0.0
  %755 = vmatprep.subr.mxu0 0.0
  %756 = vmatpush1.msra.mxu0 0.0
  %757 = vmatprep.subr.mxu0 0.0
  %758 = vmatpush1.msra.mxu0 0.0
  %759 = vmatprep.subr.mxu0 0.0
  %760 = vmatpush1.msra.mxu0 0.0
  %761 = vmatprep.subr.mxu0 0.0
  %762 = vmatpush1.msra.mxu0 0.0
  %763 = vmatprep.subr.mxu0 0.0
  %764 = vmatpush1.msra.mxu0 0.0
  %765 = vmatprep.subr.mxu0 0.0
  %766 = vmatpush1.msra.mxu0 0.0
  %767 = vmatprep.subr.mxu0 0.0
  %768 = vmatpush1.msra.mxu0 %v74
  %769 = vmatprep.subr.mxu0 0.0
  %770 = vmatpush1.msra.mxu0 %v73
  %771 = vmatprep.subr.mxu0 0.0
  %772 = vmatpush1.msra.mxu0 %v72
  %773 = vmatprep.subr.mxu0 0.0
  %774 = vmatpush1.msra.mxu0 %v71
  %775 = vmatprep.subr.mxu0 0.0
  %776 = vmatpush2.msra.mxu0 0.0
  %777 = vmatprep.subr.mxu0 0.0
  %778 = vmatpush2.msra.mxu0 0.0
  %779 = vmatprep.subr.mxu0 0.0
  %780 = vmatpush2.msra.mxu0 0.0
  %781 = vmatprep.subr.mxu0 0.0
  %782 = vmatpush2.msra.mxu0 0.0
  %783 = vmatprep.subr.mxu0 0.0
  %784 = vmatpush2.msra.mxu0 0.0
  %785 = vmatprep.subr.mxu0 0.0
  %786 = vmatpush2.msra.mxu0 0.0
  %787 = vmatprep.subr.mxu0 0.0
  %788 = vmatpush2.msra.mxu0 0.0
  %789 = vmatprep.subr.mxu0 0.0
  %790 = vmatpush2.msra.mxu0 0.0
  %791 = vmatprep.subr.mxu0 0.0
  %792 = vmatpush2.msra.mxu0 0.0
  %793 = vmatprep.subr.mxu0 0.0
  %794 = vmatpush2.msra.mxu0 0.0
  %795 = vmatprep.subr.mxu0 0.0
  %796 = vmatpush2.msra.mxu0 0.0
  %797 = vmatprep.subr.mxu0 0.0
  %798 = vmatpush2.msra.mxu0 0.0
  %799 = vmatprep.subr.mxu0 0.0
  %800 = vmatpush2.msra.mxu0 0.0
  %801 = vmatprep.subr.mxu0 0.0
  %802 = vmatpush2.msra.mxu0 0.0
  %803 = vmatprep.subr.mxu0 0.0
  %804 = vmatpush2.msra.mxu0 0.0
  %805 = vmatprep.subr.mxu0 0.0
  %806 = vmatpush2.msra.mxu0 0.0
  %807 = vmatprep.mubr.f32.mxu0 0.0
  %808 = vmatmul.mubr.f32.gmra.mxu0 %v741
  %v809 = vpop.f32.mrf.mxu0
  %v810 = vadd.f32 0.0, %v809
  %v811 = vpop.f32.mrf.mxu0
  %812 = vdwg.mxu0
  %v813 = vsel %vm96, %v733, 0
  %815 = vmatprep.subr.mxu0 0.0
  %816 = vmatpush1.msra.mxu0 0.0
  %817 = vmatprep.subr.mxu0 0.0
  %818 = vmatpush1.msra.mxu0 0.0
  %819 = vmatprep.subr.mxu0 0.0
  %820 = vmatpush1.msra.mxu0 0.0
  %821 = vmatprep.subr.mxu0 0.0
  %822 = vmatpush1.msra.mxu0 0.0
  %823 = vmatprep.subr.mxu0 0.0
  %824 = vmatpush1.msra.mxu0 0.0
  %825 = vmatprep.subr.mxu0 0.0
  %826 = vmatpush1.msra.mxu0 0.0
  %827 = vmatprep.subr.mxu0 0.0
  %828 = vmatpush1.msra.mxu0 0.0
  %829 = vmatprep.subr.mxu0 0.0
  %830 = vmatpush1.msra.mxu0 0.0
  %831 = vmatprep.subr.mxu0 0.0
  %832 = vmatpush1.msra.mxu0 0.0
  %833 = vmatprep.subr.mxu0 0.0
  %834 = vmatpush1.msra.mxu0 0.0
  %835 = vmatprep.subr.mxu0 0.0
  %836 = vmatpush1.msra.mxu0 0.0
  %837 = vmatprep.subr.mxu0 0.0
  %838 = vmatpush1.msra.mxu0 0.0
  %839 = vmatprep.subr.mxu0 0.0
  %840 = vmatpush1.msra.mxu0 %v78
  %841 = vmatprep.subr.mxu0 0.0
  %842 = vmatpush1.msra.mxu0 %v77
  %843 = vmatprep.subr.mxu0 0.0
  %844 = vmatpush1.msra.mxu0 %v76
  %845 = vmatprep.subr.mxu0 0.0
  %846 = vmatpush1.msra.mxu0 %v75
  %847 = vmatprep.subr.mxu0 0.0
  %848 = vmatpush2.msra.mxu0 0.0
  %849 = vmatprep.subr.mxu0 0.0
  %850 = vmatpush2.msra.mxu0 0.0
  %851 = vmatprep.subr.mxu0 0.0
  %852 = vmatpush2.msra.mxu0 0.0
  %853 = vmatprep.subr.mxu0 0.0
  %854 = vmatpush2.msra.mxu0 0.0
  %855 = vmatprep.subr.mxu0 0.0
  %856 = vmatpush2.msra.mxu0 0.0
  %857 = vmatprep.subr.mxu0 0.0
  %858 = vmatpush2.msra.mxu0 0.0
  %859 = vmatprep.subr.mxu0 0.0
  %860 = vmatpush2.msra.mxu0 0.0
  %861 = vmatprep.subr.mxu0 0.0
  %862 = vmatpush2.msra.mxu0 0.0
  %863 = vmatprep.subr.mxu0 0.0
  %864 = vmatpush2.msra.mxu0 0.0
  %865 = vmatprep.subr.mxu0 0.0
  %866 = vmatpush2.msra.mxu0 0.0
  %867 = vmatprep.subr.mxu0 0.0
  %868 = vmatpush2.msra.mxu0 0.0
  %869 = vmatprep.subr.mxu0 0.0
  %870 = vmatpush2.msra.mxu0 0.0
  %871 = vmatprep.subr.mxu0 0.0
  %872 = vmatpush2.msra.mxu0 0.0
  %873 = vmatprep.subr.mxu0 0.0
  %874 = vmatpush2.msra.mxu0 0.0
  %875 = vmatprep.subr.mxu0 0.0
  %876 = vmatpush2.msra.mxu0 0.0
  %877 = vmatprep.subr.mxu0 0.0
  %878 = vmatpush2.msra.mxu0 0.0
  %879 = vmatprep.mubr.f32.mxu0 0.0
  %880 = vmatmul.mubr.f32.gmra.mxu0 %v813
  %v881 = vpop.f32.mrf.mxu0
  %v882 = vadd.f32 0.0, %v881
  %v883 = vpop.f32.mrf.mxu0
  %884 = vdwg.mxu0
  %v885 = vadd.f32 %v738, %v810
  %v886 = vmul.f32 %v885, 0.5
  %v887 = vtanh.pop %v886
  %v888 = vadd.f32 %v887, 1.0
  %v889 = vmul.f32 %v888, 0.5
  %v890 = vadd.f32 %v810, %v249
  %892 = vrot.lane.b32.xlu0 %v890, 64
  %v893 = vpop.permute.xlu0 %892
  %v895 = vmul.f32 %v889, %v893
  %897 = vrot.lane.b32.xlu0 %v895, 64
  %v898 = vpop.permute.xlu0 %897
  %v900 = vadd.f32 %v738, %v898
  %v901 = vtanh.pop %v900
  %v902 = vsub.f32 1.0, %v889
  %904 = vrot.lane.b32.xlu0 %v901, 96
  %v905 = vpop.permute.xlu0 %904
  %v907 = vmul.f32 %v902, %v905
  %v908 = vmul.f32 %v889, %v699
  %v909 = vadd.f32 %v907, %v908
  %v910 = vadd.f32 %v740, %v882
  %v911 = vmul.f32 %v910, 0.5
  %v912 = vtanh.pop %v911
  %v913 = vadd.f32 %v912, 1.0
  %v914 = vmul.f32 %v913, 0.5
  %v915 = vadd.f32 %v882, %v280
  %917 = vrot.lane.b32.xlu0 %v915, 64
  %v918 = vpop.permute.xlu0 %917
  %v920 = vmul.f32 %v914, %v918
  %922 = vrot.lane.b32.xlu0 %v920, 64
  %v923 = vpop.permute.xlu0 %922
  %v925 = vadd.f32 %v740, %v923
  %v926 = vtanh.pop %v925
  %v927 = vsub.f32 1.0, %v914
  %929 = vrot.lane.b32.xlu0 %v926, 96
  %v930 = vpop.permute.xlu0 %929
  %v932 = vmul.f32 %v927, %v930
  %v933 = vmul.f32 %v914, %v724
  %v934 = vadd.f32 %v932, %v933
  %936 = vrot.lane.b32.xlu0 %v909, 96
  %v937 = vpop.permute.xlu0 %936
  %s939 = scalar_lea.vmem %s6, 6
  %940 = vst.msk [vmem:[%s939] sm:$0x3] %vm309, %v937
  %942 = vrot.lane.b32.xlu0 %v934, 96
  %v943 = vpop.permute.xlu0 %942
  %s945 = scalar_lea.vmem %s61, 8
  %946 = vst.msk [vmem:[%s945] sm:$0x3] %vm309, %v943
  %s947 = scalar_lea.vmem %s0, 8
  %v948 = vld [vmem:[%s947] sm:$0x3]
  %s949 = scalar_lea.vmem %s53, 6
  %v950 = vld [vmem:[%s949] sm:$0x3]
  %v951 = vsel %vm96, %v937, 0
  %953 = vmatprep.subr.mxu0 0.0
  %954 = vmatpush1.msra.mxu0 0.0
  %955 = vmatprep.subr.mxu0 0.0
  %956 = vmatpush1.msra.mxu0 0.0
  %957 = vmatprep.subr.mxu0 0.0
  %958 = vmatpush1.msra.mxu0 0.0
  %959 = vmatprep.subr.mxu0 0.0
  %960 = vmatpush1.msra.mxu0 0.0
  %961 = vmatprep.subr.mxu0 0.0
  %962 = vmatpush1.msra.mxu0 0.0
  %963 = vmatprep.subr.mxu0 0.0
  %964 = vmatpush1.msra.mxu0 0.0
  %965 = vmatprep.subr.mxu0 0.0
  %966 = vmatpush1.msra.mxu0 0.0
  %967 = vmatprep.subr.mxu0 0.0
  %968 = vmatpush1.msra.mxu0 0.0
  %969 = vmatprep.subr.mxu0 0.0
  %970 = vmatpush1.msra.mxu0 0.0
  %971 = vmatprep.subr.mxu0 0.0
  %972 = vmatpush1.msra.mxu0 0.0
  %973 = vmatprep.subr.mxu0 0.0
  %974 = vmatpush1.msra.mxu0 0.0
  %975 = vmatprep.subr.mxu0 0.0
  %976 = vmatpush1.msra.mxu0 0.0
  %977 = vmatprep.subr.mxu0 0.0
  %978 = vmatpush1.msra.mxu0 %v74
  %979 = vmatprep.subr.mxu0 0.0
  %980 = vmatpush1.msra.mxu0 %v73
  %981 = vmatprep.subr.mxu0 0.0
  %982 = vmatpush1.msra.mxu0 %v72
  %983 = vmatprep.subr.mxu0 0.0
  %984 = vmatpush1.msra.mxu0 %v71
  %985 = vmatprep.subr.mxu0 0.0
  %986 = vmatpush2.msra.mxu0 0.0
  %987 = vmatprep.subr.mxu0 0.0
  %988 = vmatpush2.msra.mxu0 0.0
  %989 = vmatprep.subr.mxu0 0.0
  %990 = vmatpush2.msra.mxu0 0.0
  %991 = vmatprep.subr.mxu0 0.0
  %992 = vmatpush2.msra.mxu0 0.0
  %993 = vmatprep.subr.mxu0 0.0
  %994 = vmatpush2.msra.mxu0 0.0
  %995 = vmatprep.subr.mxu0 0.0
  %996 = vmatpush2.msra.mxu0 0.0
  %997 = vmatprep.subr.mxu0 0.0
  %998 = vmatpush2.msra.mxu0 0.0
  %999 = vmatprep.subr.mxu0 0.0
  %1000 = vmatpush2.msra.mxu0 0.0
  %1001 = vmatprep.subr.mxu0 0.0
  %1002 = vmatpush2.msra.mxu0 0.0
  %1003 = vmatprep.subr.mxu0 0.0
  %1004 = vmatpush2.msra.mxu0 0.0
  %1005 = vmatprep.subr.mxu0 0.0
  %1006 = vmatpush2.msra.mxu0 0.0
  %1007 = vmatprep.subr.mxu0 0.0
  %1008 = vmatpush2.msra.mxu0 0.0
  %1009 = vmatprep.subr.mxu0 0.0
  %1010 = vmatpush2.msra.mxu0 0.0
  %1011 = vmatprep.subr.mxu0 0.0
  %1012 = vmatpush2.msra.mxu0 0.0
  %1013 = vmatprep.subr.mxu0 0.0
  %1014 = vmatpush2.msra.mxu0 0.0
  %1015 = vmatprep.subr.mxu0 0.0
  %1016 = vmatpush2.msra.mxu0 0.0
  %1017 = vmatprep.mubr.f32.mxu0 0.0
  %1018 = vmatmul.mubr.f32.gmra.mxu0 %v951
  %v1019 = vpop.f32.mrf.mxu0
  %v1020 = vadd.f32 0.0, %v1019
  %v1021 = vpop.f32.mrf.mxu0
  %1022 = vdwg.mxu0
  %v1023 = vsel %vm96, %v943, 0
  %1025 = vmatprep.subr.mxu0 0.0
  %1026 = vmatpush1.msra.mxu0 0.0
  %1027 = vmatprep.subr.mxu0 0.0
  %1028 = vmatpush1.msra.mxu0 0.0
  %1029 = vmatprep.subr.mxu0 0.0
  %1030 = vmatpush1.msra.mxu0 0.0
  %1031 = vmatprep.subr.mxu0 0.0
  %1032 = vmatpush1.msra.mxu0 0.0
  %1033 = vmatprep.subr.mxu0 0.0
  %1034 = vmatpush1.msra.mxu0 0.0
  %1035 = vmatprep.subr.mxu0 0.0
  %1036 = vmatpush1.msra.mxu0 0.0
  %1037 = vmatprep.subr.mxu0 0.0
  %1038 = vmatpush1.msra.mxu0 0.0
  %1039 = vmatprep.subr.mxu0 0.0
  %1040 = vmatpush1.msra.mxu0 0.0
  %1041 = vmatprep.subr.mxu0 0.0
  %1042 = vmatpush1.msra.mxu0 0.0
  %1043 = vmatprep.subr.mxu0 0.0
  %1044 = vmatpush1.msra.mxu0 0.0
  %1045 = vmatprep.subr.mxu0 0.0
  %1046 = vmatpush1.msra.mxu0 0.0
  %1047 = vmatprep.subr.mxu0 0.0
  %1048 = vmatpush1.msra.mxu0 0.0
  %1049 = vmatprep.subr.mxu0 0.0
  %1050 = vmatpush1.msra.mxu0 %v78
  %1051 = vmatprep.subr.mxu0 0.0
  %1052 = vmatpush1.msra.mxu0 %v77
  %1053 = vmatprep.subr.mxu0 0.0
  %1054 = vmatpush1.msra.mxu0 %v76
  %1055 = vmatprep.subr.mxu0 0.0
  %1056 = vmatpush1.msra.mxu0 %v75
  %1057 = vmatprep.subr.mxu0 0.0
  %1058 = vmatpush2.msra.mxu0 0.0
  %1059 = vmatprep.subr.mxu0 0.0
  %1060 = vmatpush2.msra.mxu0 0.0
  %1061 = vmatprep.subr.mxu0 0.0
  %1062 = vmatpush2.msra.mxu0 0.0
  %1063 = vmatprep.subr.mxu0 0.0
  %1064 = vmatpush2.msra.mxu0 0.0
  %1065 = vmatprep.subr.mxu0 0.0
  %1066 = vmatpush2.msra.mxu0 0.0
  %1067 = vmatprep.subr.mxu0 0.0
  %1068 = vmatpush2.msra.mxu0 0.0
  %1069 = vmatprep.subr.mxu0 0.0
  %1070 = vmatpush2.msra.mxu0 0.0
  %1071 = vmatprep.subr.mxu0 0.0
  %1072 = vmatpush2.msra.mxu0 0.0
  %1073 = vmatprep.subr.mxu0 0.0
  %1074 = vmatpush2.msra.mxu0 0.0
  %1075 = vmatprep.subr.mxu0 0.0
  %1076 = vmatpush2.msra.mxu0 0.0
  %1077 = vmatprep.subr.mxu0 0.0
  %1078 = vmatpush2.msra.mxu0 0.0
  %1079 = vmatprep.subr.mxu0 0.0
  %1080 = vmatpush2.msra.mxu0 0.0
  %1081 = vmatprep.subr.mxu0 0.0
  %1082 = vmatpush2.msra.mxu0 0.0
  %1083 = vmatprep.subr.mxu0 0.0
  %1084 = vmatpush2.msra.mxu0 0.0
  %1085 = vmatprep.subr.mxu0 0.0
  %1086 = vmatpush2.msra.mxu0 0.0
  %1087 = vmatprep.subr.mxu0 0.0
  %1088 = vmatpush2.msra.mxu0 0.0
  %1089 = vmatprep.mubr.f32.mxu0 0.0
  %1090 = vmatmul.mubr.f32.gmra.mxu0 %v1023
  %v1091 = vpop.f32.mrf.mxu0
  %v1092 = vadd.f32 0.0, %v1091
  %v1093 = vpop.f32.mrf.mxu0
  %1094 = vdwg.mxu0
  %v1095 = vadd.f32 %v948, %v1020
  %v1096 = vmul.f32 %v1095, 0.5
  %v1097 = vtanh.pop %v1096
  %v1098 = vadd.f32 %v1097, 1.0
  %v1099 = vmul.f32 %v1098, 0.5
  %v1100 = vadd.f32 %v1020, %v249
  %1102 = vrot.lane.b32.xlu0 %v1100, 64
  %v1103 = vpop.permute.xlu0 %1102
  %v1105 = vmul.f32 %v1099, %v1103
  %1107 = vrot.lane.b32.xlu0 %v1105, 64
  %v1108 = vpop.permute.xlu0 %1107
  %v1110 = vadd.f32 %v948, %v1108
  %v1111 = vtanh.pop %v1110
  %v1112 = vsub.f32 1.0, %v1099
  %1114 = vrot.lane.b32.xlu0 %v1111, 96
  %v1115 = vpop.permute.xlu0 %1114
  %v1117 = vmul.f32 %v1112, %v1115
  %v1118 = vmul.f32 %v1099, %v909
  %v1119 = vadd.f32 %v1117, %v1118
  %v1120 = vadd.f32 %v950, %v1092
  %v1121 = vmul.f32 %v1120, 0.5
  %v1122 = vtanh.pop %v1121
  %v1123 = vadd.f32 %v1122, 1.0
  %v1124 = vmul.f32 %v1123, 0.5
  %v1125 = vadd.f32 %v1092, %v280
  %1127 = vrot.lane.b32.xlu0 %v1125, 64
  %v1128 = vpop.permute.xlu0 %1127
  %v1130 = vmul.f32 %v1124, %v1128
  %1132 = vrot.lane.b32.xlu0 %v1130, 64
  %v1133 = vpop.permute.xlu0 %1132
  %v1135 = vadd.f32 %v950, %v1133
  %v1136 = vtanh.pop %v1135
  %v1137 = vsub.f32 1.0, %v1124
  %1139 = vrot.lane.b32.xlu0 %v1136, 96
  %v1140 = vpop.permute.xlu0 %1139
  %v1142 = vmul.f32 %v1137, %v1140
  %v1143 = vmul.f32 %v1124, %v934
  %v1144 = vadd.f32 %v1142, %v1143
  %1146 = vrot.lane.b32.xlu0 %v1119, 96
  %v1147 = vpop.permute.xlu0 %1146
  %s1149 = scalar_lea.vmem %s6, 8
  %1150 = vst.msk [vmem:[%s1149] sm:$0x3] %vm309, %v1147
  %1152 = vrot.lane.b32.xlu0 %v1144, 96
  %v1153 = vpop.permute.xlu0 %1152
  %s1155 = scalar_lea.vmem %s61, 6
  %1156 = vst.msk [vmem:[%s1155] sm:$0x3] %vm309, %v1153
  %s1157 = scalar_lea.vmem %s0, 10
  %v1158 = vld [vmem:[%s1157] sm:$0x3]
  %s1159 = scalar_lea.vmem %s53, 4
  %v1160 = vld [vmem:[%s1159] sm:$0x3]
  %v1161 = vsel %vm96, %v1147, 0
  %1163 = vmatprep.subr.mxu0 0.0
  %1164 = vmatpush1.msra.mxu0 0.0
  %1165 = vmatprep.subr.mxu0 0.0
  %1166 = vmatpush1.msra.mxu0 0.0
  %1167 = vmatprep.subr.mxu0 0.0
  %1168 = vmatpush1.msra.mxu0 0.0
  %1169 = vmatprep.subr.mxu0 0.0
  %1170 = vmatpush1.msra.mxu0 0.0
  %1171 = vmatprep.subr.mxu0 0.0
  %1172 = vmatpush1.msra.mxu0 0.0
  %1173 = vmatprep.subr.mxu0 0.0
  %1174 = vmatpush1.msra.mxu0 0.0
  %1175 = vmatprep.subr.mxu0 0.0
  %1176 = vmatpush1.msra.mxu0 0.0
  %1177 = vmatprep.subr.mxu0 0.0
  %1178 = vmatpush1.msra.mxu0 0.0
  %1179 = vmatprep.subr.mxu0 0.0
  %1180 = vmatpush1.msra.mxu0 0.0
  %1181 = vmatprep.subr.mxu0 0.0
  %1182 = vmatpush1.msra.mxu0 0.0
  %1183 = vmatprep.subr.mxu0 0.0
  %1184 = vmatpush1.msra.mxu0 0.0
  %1185 = vmatprep.subr.mxu0 0.0
  %1186 = vmatpush1.msra.mxu0 0.0
  %1187 = vmatprep.subr.mxu0 0.0
  %1188 = vmatpush1.msra.mxu0 %v74
  %1189 = vmatprep.subr.mxu0 0.0
  %1190 = vmatpush1.msra.mxu0 %v73
  %1191 = vmatprep.subr.mxu0 0.0
  %1192 = vmatpush1.msra.mxu0 %v72
  %1193 = vmatprep.subr.mxu0 0.0
  %1194 = vmatpush1.msra.mxu0 %v71
  %1195 = vmatprep.subr.mxu0 0.0
  %1196 = vmatpush2.msra.mxu0 0.0
  %1197 = vmatprep.subr.mxu0 0.0
  %1198 = vmatpush2.msra.mxu0 0.0
  %1199 = vmatprep.subr.mxu0 0.0
  %1200 = vmatpush2.msra.mxu0 0.0
  %1201 = vmatprep.subr.mxu0 0.0
  %1202 = vmatpush2.msra.mxu0 0.0
  %1203 = vmatprep.subr.mxu0 0.0
  %1204 = vmatpush2.msra.mxu0 0.0
  %1205 = vmatprep.subr.mxu0 0.0
  %1206 = vmatpush2.msra.mxu0 0.0
  %1207 = vmatprep.subr.mxu0 0.0
  %1208 = vmatpush2.msra.mxu0 0.0
  %1209 = vmatprep.subr.mxu0 0.0
  %1210 = vmatpush2.msra.mxu0 0.0
  %1211 = vmatprep.subr.mxu0 0.0
  %1212 = vmatpush2.msra.mxu0 0.0
  %1213 = vmatprep.subr.mxu0 0.0
  %1214 = vmatpush2.msra.mxu0 0.0
  %1215 = vmatprep.subr.mxu0 0.0
  %1216 = vmatpush2.msra.mxu0 0.0
  %1217 = vmatprep.subr.mxu0 0.0
  %1218 = vmatpush2.msra.mxu0 0.0
  %1219 = vmatprep.subr.mxu0 0.0
  %1220 = vmatpush2.msra.mxu0 0.0
  %1221 = vmatprep.subr.mxu0 0.0
  %1222 = vmatpush2.msra.mxu0 0.0
  %1223 = vmatprep.subr.mxu0 0.0
  %1224 = vmatpush2.msra.mxu0 0.0
  %1225 = vmatprep.subr.mxu0 0.0
  %1226 = vmatpush2.msra.mxu0 0.0
  %1227 = vmatprep.mubr.f32.mxu0 0.0
  %1228 = vmatmul.mubr.f32.gmra.mxu0 %v1161
  %v1229 = vpop.f32.mrf.mxu0
  %v1230 = vadd.f32 0.0, %v1229
  %v1231 = vpop.f32.mrf.mxu0
  %1232 = vdwg.mxu0
  %v1233 = vsel %vm96, %v1153, 0
  %1235 = vmatprep.subr.mxu0 0.0
  %1236 = vmatpush1.msra.mxu0 0.0
  %1237 = vmatprep.subr.mxu0 0.0
  %1238 = vmatpush1.msra.mxu0 0.0
  %1239 = vmatprep.subr.mxu0 0.0
  %1240 = vmatpush1.msra.mxu0 0.0
  %1241 = vmatprep.subr.mxu0 0.0
  %1242 = vmatpush1.msra.mxu0 0.0
  %1243 = vmatprep.subr.mxu0 0.0
  %1244 = vmatpush1.msra.mxu0 0.0
  %1245 = vmatprep.subr.mxu0 0.0
  %1246 = vmatpush1.msra.mxu0 0.0
  %1247 = vmatprep.subr.mxu0 0.0
  %1248 = vmatpush1.msra.mxu0 0.0
  %1249 = vmatprep.subr.mxu0 0.0
  %1250 = vmatpush1.msra.mxu0 0.0
  %1251 = vmatprep.subr.mxu0 0.0
  %1252 = vmatpush1.msra.mxu0 0.0
  %1253 = vmatprep.subr.mxu0 0.0
  %1254 = vmatpush1.msra.mxu0 0.0
  %1255 = vmatprep.subr.mxu0 0.0
  %1256 = vmatpush1.msra.mxu0 0.0
  %1257 = vmatprep.subr.mxu0 0.0
  %1258 = vmatpush1.msra.mxu0 0.0
  %1259 = vmatprep.subr.mxu0 0.0
  %1260 = vmatpush1.msra.mxu0 %v78
  %1261 = vmatprep.subr.mxu0 0.0
  %1262 = vmatpush1.msra.mxu0 %v77
  %1263 = vmatprep.subr.mxu0 0.0
  %1264 = vmatpush1.msra.mxu0 %v76
  %1265 = vmatprep.subr.mxu0 0.0
  %1266 = vmatpush1.msra.mxu0 %v75
  %1267 = vmatprep.subr.mxu0 0.0
  %1268 = vmatpush2.msra.mxu0 0.0
  %1269 = vmatprep.subr.mxu0 0.0
  %1270 = vmatpush2.msra.mxu0 0.0
  %1271 = vmatprep.subr.mxu0 0.0
  %1272 = vmatpush2.msra.mxu0 0.0
  %1273 = vmatprep.subr.mxu0 0.0
  %1274 = vmatpush2.msra.mxu0 0.0
  %1275 = vmatprep.subr.mxu0 0.0
  %1276 = vmatpush2.msra.mxu0 0.0
  %1277 = vmatprep.subr.mxu0 0.0
  %1278 = vmatpush2.msra.mxu0 0.0
  %1279 = vmatprep.subr.mxu0 0.0
  %1280 = vmatpush2.msra.mxu0 0.0
  %1281 = vmatprep.subr.mxu0 0.0
  %1282 = vmatpush2.msra.mxu0 0.0
  %1283 = vmatprep.subr.mxu0 0.0
  %1284 = vmatpush2.msra.mxu0 0.0
  %1285 = vmatprep.subr.mxu0 0.0
  %1286 = vmatpush2.msra.mxu0 0.0
  %1287 = vmatprep.subr.mxu0 0.0
  %1288 = vmatpush2.msra.mxu0 0.0
  %1289 = vmatprep.subr.mxu0 0.0
  %1290 = vmatpush2.msra.mxu0 0.0
  %1291 = vmatprep.subr.mxu0 0.0
  %1292 = vmatpush2.msra.mxu0 0.0
  %1293 = vmatprep.subr.mxu0 0.0
  %1294 = vmatpush2.msra.mxu0 0.0
  %1295 = vmatprep.subr.mxu0 0.0
  %1296 = vmatpush2.msra.mxu0 0.0
  %1297 = vmatprep.subr.mxu0 0.0
  %1298 = vmatpush2.msra.mxu0 0.0
  %1299 = vmatprep.mubr.f32.mxu0 0.0
  %1300 = vmatmul.mubr.f32.gmra.mxu0 %v1233
  %v1301 = vpop.f32.mrf.mxu0
  %v1302 = vadd.f32 0.0, %v1301
  %v1303 = vpop.f32.mrf.mxu0
  %1304 = vdwg.mxu0
  %v1305 = vadd.f32 %v1158, %v1230
  %v1306 = vmul.f32 %v1305, 0.5
  %v1307 = vtanh.pop %v1306
  %v1308 = vadd.f32 %v1307, 1.0
  %v1309 = vmul.f32 %v1308, 0.5
  %v1310 = vadd.f32 %v1230, %v249
  %1312 = vrot.lane.b32.xlu0 %v1310, 64
  %v1313 = vpop.permute.xlu0 %1312
  %v1315 = vmul.f32 %v1309, %v1313
  %1317 = vrot.lane.b32.xlu0 %v1315, 64
  %v1318 = vpop.permute.xlu0 %1317
  %v1320 = vadd.f32 %v1158, %v1318
  %v1321 = vtanh.pop %v1320
  %v1322 = vsub.f32 1.0, %v1309
  %1324 = vrot.lane.b32.xlu0 %v1321, 96
  %v1325 = vpop.permute.xlu0 %1324
  %v1327 = vmul.f32 %v1322, %v1325
  %v1328 = vmul.f32 %v1309, %v1119
  %v1329 = vadd.f32 %v1327, %v1328
  %v1330 = vadd.f32 %v1160, %v1302
  %v1331 = vmul.f32 %v1330, 0.5
  %v1332 = vtanh.pop %v1331
  %v1333 = vadd.f32 %v1332, 1.0
  %v1334 = vmul.f32 %v1333, 0.5
  %v1335 = vadd.f32 %v1302, %v280
  %1337 = vrot.lane.b32.xlu0 %v1335, 64
  %v1338 = vpop.permute.xlu0 %1337
  %v1340 = vmul.f32 %v1334, %v1338
  %1342 = vrot.lane.b32.xlu0 %v1340, 64
  %v1343 = vpop.permute.xlu0 %1342
  %v1345 = vadd.f32 %v1160, %v1343
  %v1346 = vtanh.pop %v1345
  %v1347 = vsub.f32 1.0, %v1334
  %1349 = vrot.lane.b32.xlu0 %v1346, 96
  %v1350 = vpop.permute.xlu0 %1349
  %v1352 = vmul.f32 %v1347, %v1350
  %v1353 = vmul.f32 %v1334, %v1144
  %v1354 = vadd.f32 %v1352, %v1353
  %1356 = vrot.lane.b32.xlu0 %v1329, 96
  %v1357 = vpop.permute.xlu0 %1356
  %s1359 = scalar_lea.vmem %s6, 10
  %1360 = vst.msk [vmem:[%s1359] sm:$0x3] %vm309, %v1357
  %1362 = vrot.lane.b32.xlu0 %v1354, 96
  %v1363 = vpop.permute.xlu0 %1362
  %s1365 = scalar_lea.vmem %s61, 4
  %1366 = vst.msk [vmem:[%s1365] sm:$0x3] %vm309, %v1363
  %s1367 = scalar_lea.vmem %s0, 12
  %v1368 = vld [vmem:[%s1367] sm:$0x3]
  %s1369 = scalar_lea.vmem %s53, 2
  %v1370 = vld [vmem:[%s1369] sm:$0x3]
  %v1371 = vsel %vm96, %v1357, 0
  %1373 = vmatprep.subr.mxu0 0.0
  %1374 = vmatpush1.msra.mxu0 0.0
  %1375 = vmatprep.subr.mxu0 0.0
  %1376 = vmatpush1.msra.mxu0 0.0
  %1377 = vmatprep.subr.mxu0 0.0
  %1378 = vmatpush1.msra.mxu0 0.0
  %1379 = vmatprep.subr.mxu0 0.0
  %1380 = vmatpush1.msra.mxu0 0.0
  %1381 = vmatprep.subr.mxu0 0.0
  %1382 = vmatpush1.msra.mxu0 0.0
  %1383 = vmatprep.subr.mxu0 0.0
  %1384 = vmatpush1.msra.mxu0 0.0
  %1385 = vmatprep.subr.mxu0 0.0
  %1386 = vmatpush1.msra.mxu0 0.0
  %1387 = vmatprep.subr.mxu0 0.0
  %1388 = vmatpush1.msra.mxu0 0.0
  %1389 = vmatprep.subr.mxu0 0.0
  %1390 = vmatpush1.msra.mxu0 0.0
  %1391 = vmatprep.subr.mxu0 0.0
  %1392 = vmatpush1.msra.mxu0 0.0
  %1393 = vmatprep.subr.mxu0 0.0
  %1394 = vmatpush1.msra.mxu0 0.0
  %1395 = vmatprep.subr.mxu0 0.0
  %1396 = vmatpush1.msra.mxu0 0.0
  %1397 = vmatprep.subr.mxu0 0.0
  %1398 = vmatpush1.msra.mxu0 %v74
  %1399 = vmatprep.subr.mxu0 0.0
  %1400 = vmatpush1.msra.mxu0 %v73
  %1401 = vmatprep.subr.mxu0 0.0
  %1402 = vmatpush1.msra.mxu0 %v72
  %1403 = vmatprep.subr.mxu0 0.0
  %1404 = vmatpush1.msra.mxu0 %v71
  %1405 = vmatprep.subr.mxu0 0.0
  %1406 = vmatpush2.msra.mxu0 0.0
  %1407 = vmatprep.subr.mxu0 0.0
  %1408 = vmatpush2.msra.mxu0 0.0
  %1409 = vmatprep.subr.mxu0 0.0
  %1410 = vmatpush2.msra.mxu0 0.0
  %1411 = vmatprep.subr.mxu0 0.0
  %1412 = vmatpush2.msra.mxu0 0.0
  %1413 = vmatprep.subr.mxu0 0.0
  %1414 = vmatpush2.msra.mxu0 0.0
  %1415 = vmatprep.subr.mxu0 0.0
  %1416 = vmatpush2.msra.mxu0 0.0
  %1417 = vmatprep.subr.mxu0 0.0
  %1418 = vmatpush2.msra.mxu0 0.0
  %1419 = vmatprep.subr.mxu0 0.0
  %1420 = vmatpush2.msra.mxu0 0.0
  %1421 = vmatprep.subr.mxu0 0.0
  %1422 = vmatpush2.msra.mxu0 0.0
  %1423 = vmatprep.subr.mxu0 0.0
  %1424 = vmatpush2.msra.mxu0 0.0
  %1425 = vmatprep.subr.mxu0 0.0
  %1426 = vmatpush2.msra.mxu0 0.0
  %1427 = vmatprep.subr.mxu0 0.0
  %1428 = vmatpush2.msra.mxu0 0.0
  %1429 = vmatprep.subr.mxu0 0.0
  %1430 = vmatpush2.msra.mxu0 0.0
  %1431 = vmatprep.subr.mxu0 0.0
  %1432 = vmatpush2.msra.mxu0 0.0
  %1433 = vmatprep.subr.mxu0 0.0
  %1434 = vmatpush2.msra.mxu0 0.0
  %1435 = vmatprep.subr.mxu0 0.0
  %1436 = vmatpush2.msra.mxu0 0.0
  %1437 = vmatprep.mubr.f32.mxu0 0.0
  %1438 = vmatmul.mubr.f32.gmra.mxu0 %v1371
  %v1439 = vpop.f32.mrf.mxu0
  %v1440 = vadd.f32 0.0, %v1439
  %v1441 = vpop.f32.mrf.mxu0
  %1442 = vdwg.mxu0
  %v1443 = vsel %vm96, %v1363, 0
  %1445 = vmatprep.subr.mxu0 0.0
  %1446 = vmatpush1.msra.mxu0 0.0
  %1447 = vmatprep.subr.mxu0 0.0
  %1448 = vmatpush1.msra.mxu0 0.0
  %1449 = vmatprep.subr.mxu0 0.0
  %1450 = vmatpush1.msra.mxu0 0.0
  %1451 = vmatprep.subr.mxu0 0.0
  %1452 = vmatpush1.msra.mxu0 0.0
  %1453 = vmatprep.subr.mxu0 0.0
  %1454 = vmatpush1.msra.mxu0 0.0
  %1455 = vmatprep.subr.mxu0 0.0
  %1456 = vmatpush1.msra.mxu0 0.0
  %1457 = vmatprep.subr.mxu0 0.0
  %1458 = vmatpush1.msra.mxu0 0.0
  %1459 = vmatprep.subr.mxu0 0.0
  %1460 = vmatpush1.msra.mxu0 0.0
  %1461 = vmatprep.subr.mxu0 0.0
  %1462 = vmatpush1.msra.mxu0 0.0
  %1463 = vmatprep.subr.mxu0 0.0
  %1464 = vmatpush1.msra.mxu0 0.0
  %1465 = vmatprep.subr.mxu0 0.0
  %1466 = vmatpush1.msra.mxu0 0.0
  %1467 = vmatprep.subr.mxu0 0.0
  %1468 = vmatpush1.msra.mxu0 0.0
  %1469 = vmatprep.subr.mxu0 0.0
  %1470 = vmatpush1.msra.mxu0 %v78
  %1471 = vmatprep.subr.mxu0 0.0
  %1472 = vmatpush1.msra.mxu0 %v77
  %1473 = vmatprep.subr.mxu0 0.0
  %1474 = vmatpush1.msra.mxu0 %v76
  %1475 = vmatprep.subr.mxu0 0.0
  %1476 = vmatpush1.msra.mxu0 %v75
  %1477 = vmatprep.subr.mxu0 0.0
  %1478 = vmatpush2.msra.mxu0 0.0
  %1479 = vmatprep.subr.mxu0 0.0
  %1480 = vmatpush2.msra.mxu0 0.0
  %1481 = vmatprep.subr.mxu0 0.0
  %1482 = vmatpush2.msra.mxu0 0.0
  %1483 = vmatprep.subr.mxu0 0.0
  %1484 = vmatpush2.msra.mxu0 0.0
  %1485 = vmatprep.subr.mxu0 0.0
  %1486 = vmatpush2.msra.mxu0 0.0
  %1487 = vmatprep.subr.mxu0 0.0
  %1488 = vmatpush2.msra.mxu0 0.0
  %1489 = vmatprep.subr.mxu0 0.0
  %1490 = vmatpush2.msra.mxu0 0.0
  %1491 = vmatprep.subr.mxu0 0.0
  %1492 = vmatpush2.msra.mxu0 0.0
  %1493 = vmatprep.subr.mxu0 0.0
  %1494 = vmatpush2.msra.mxu0 0.0
  %1495 = vmatprep.subr.mxu0 0.0
  %1496 = vmatpush2.msra.mxu0 0.0
  %1497 = vmatprep.subr.mxu0 0.0
  %1498 = vmatpush2.msra.mxu0 0.0
  %1499 = vmatprep.subr.mxu0 0.0
  %1500 = vmatpush2.msra.mxu0 0.0
  %1501 = vmatprep.subr.mxu0 0.0
  %1502 = vmatpush2.msra.mxu0 0.0
  %1503 = vmatprep.subr.mxu0 0.0
  %1504 = vmatpush2.msra.mxu0 0.0
  %1505 = vmatprep.subr.mxu0 0.0
  %1506 = vmatpush2.msra.mxu0 0.0
  %1507 = vmatprep.subr.mxu0 0.0
  %1508 = vmatpush2.msra.mxu0 0.0
  %1509 = vmatprep.mubr.f32.mxu0 0.0
  %1510 = vmatmul.mubr.f32.gmra.mxu0 %v1443
  %v1511 = vpop.f32.mrf.mxu0
  %v1512 = vadd.f32 0.0, %v1511
  %v1513 = vpop.f32.mrf.mxu0
  %1514 = vdwg.mxu0
  %v1515 = vadd.f32 %v1368, %v1440
  %v1516 = vmul.f32 %v1515, 0.5
  %v1517 = vtanh.pop %v1516
  %v1518 = vadd.f32 %v1517, 1.0
  %v1519 = vmul.f32 %v1518, 0.5
  %v1520 = vadd.f32 %v1440, %v249
  %1522 = vrot.lane.b32.xlu0 %v1520, 64
  %v1523 = vpop.permute.xlu0 %1522
  %v1525 = vmul.f32 %v1519, %v1523
  %1527 = vrot.lane.b32.xlu0 %v1525, 64
  %v1528 = vpop.permute.xlu0 %1527
  %v1530 = vadd.f32 %v1368, %v1528
  %v1531 = vtanh.pop %v1530
  %v1532 = vsub.f32 1.0, %v1519
  %1534 = vrot.lane.b32.xlu0 %v1531, 96
  %v1535 = vpop.permute.xlu0 %1534
  %v1537 = vmul.f32 %v1532, %v1535
  %v1538 = vmul.f32 %v1519, %v1329
  %v1539 = vadd.f32 %v1537, %v1538
  %v1540 = vadd.f32 %v1370, %v1512
  %v1541 = vmul.f32 %v1540, 0.5
  %v1542 = vtanh.pop %v1541
  %v1543 = vadd.f32 %v1542, 1.0
  %v1544 = vmul.f32 %v1543, 0.5
  %v1545 = vadd.f32 %v1512, %v280
  %1547 = vrot.lane.b32.xlu0 %v1545, 64
  %v1548 = vpop.permute.xlu0 %1547
  %v1550 = vmul.f32 %v1544, %v1548
  %1552 = vrot.lane.b32.xlu0 %v1550, 64
  %v1553 = vpop.permute.xlu0 %1552
  %v1555 = vadd.f32 %v1370, %v1553
  %v1556 = vtanh.pop %v1555
  %v1557 = vsub.f32 1.0, %v1544
  %1559 = vrot.lane.b32.xlu0 %v1556, 96
  %v1560 = vpop.permute.xlu0 %1559
  %v1562 = vmul.f32 %v1557, %v1560
  %v1563 = vmul.f32 %v1544, %v1354
  %v1564 = vadd.f32 %v1562, %v1563
  %1566 = vrot.lane.b32.xlu0 %v1539, 96
  %v1567 = vpop.permute.xlu0 %1566
  %s1569 = scalar_lea.vmem %s6, 12
  %1570 = vst.msk [vmem:[%s1569] sm:$0x3] %vm309, %v1567
  %1572 = vrot.lane.b32.xlu0 %v1564, 96
  %v1573 = vpop.permute.xlu0 %1572
  %s1575 = scalar_lea.vmem %s61, 2
  %1576 = vst.msk [vmem:[%s1575] sm:$0x3] %vm309, %v1573
  %s1577 = scalar_lea.vmem %s0, 14
  %v1578 = vld [vmem:[%s1577] sm:$0x3]
  %v1579 = vld [vmem:[%s53] sm:$0x3]
  %v1580 = vsel %vm96, %v1567, 0
  %1582 = vmatprep.subr.mxu0 0.0
  %1583 = vmatpush1.msra.mxu0 0.0
  %1584 = vmatprep.subr.mxu0 0.0
  %1585 = vmatpush1.msra.mxu0 0.0
  %1586 = vmatprep.subr.mxu0 0.0
  %1587 = vmatpush1.msra.mxu0 0.0
  %1588 = vmatprep.subr.mxu0 0.0
  %1589 = vmatpush1.msra.mxu0 0.0
  %1590 = vmatprep.subr.mxu0 0.0
  %1591 = vmatpush1.msra.mxu0 0.0
  %1592 = vmatprep.subr.mxu0 0.0
  %1593 = vmatpush1.msra.mxu0 0.0
  %1594 = vmatprep.subr.mxu0 0.0
  %1595 = vmatpush1.msra.mxu0 0.0
  %1596 = vmatprep.subr.mxu0 0.0
  %1597 = vmatpush1.msra.mxu0 0.0
  %1598 = vmatprep.subr.mxu0 0.0
  %1599 = vmatpush1.msra.mxu0 0.0
  %1600 = vmatprep.subr.mxu0 0.0
  %1601 = vmatpush1.msra.mxu0 0.0
  %1602 = vmatprep.subr.mxu0 0.0
  %1603 = vmatpush1.msra.mxu0 0.0
  %1604 = vmatprep.subr.mxu0 0.0
  %1605 = vmatpush1.msra.mxu0 0.0
  %1606 = vmatprep.subr.mxu0 0.0
  %1607 = vmatpush1.msra.mxu0 %v74
  %1608 = vmatprep.subr.mxu0 0.0
  %1609 = vmatpush1.msra.mxu0 %v73
  %1610 = vmatprep.subr.mxu0 0.0
  %1611 = vmatpush1.msra.mxu0 %v72
  %1612 = vmatprep.subr.mxu0 0.0
  %1613 = vmatpush1.msra.mxu0 %v71
  %1614 = vmatprep.subr.mxu0 0.0
  %1615 = vmatpush2.msra.mxu0 0.0
  %1616 = vmatprep.subr.mxu0 0.0
  %1617 = vmatpush2.msra.mxu0 0.0
  %1618 = vmatprep.subr.mxu0 0.0
  %1619 = vmatpush2.msra.mxu0 0.0
  %1620 = vmatprep.subr.mxu0 0.0
  %1621 = vmatpush2.msra.mxu0 0.0
  %1622 = vmatprep.subr.mxu0 0.0
  %1623 = vmatpush2.msra.mxu0 0.0
  %1624 = vmatprep.subr.mxu0 0.0
  %1625 = vmatpush2.msra.mxu0 0.0
  %1626 = vmatprep.subr.mxu0 0.0
  %1627 = vmatpush2.msra.mxu0 0.0
  %1628 = vmatprep.subr.mxu0 0.0
  %1629 = vmatpush2.msra.mxu0 0.0
  %1630 = vmatprep.subr.mxu0 0.0
  %1631 = vmatpush2.msra.mxu0 0.0
  %1632 = vmatprep.subr.mxu0 0.0
  %1633 = vmatpush2.msra.mxu0 0.0
  %1634 = vmatprep.subr.mxu0 0.0
  %1635 = vmatpush2.msra.mxu0 0.0
  %1636 = vmatprep.subr.mxu0 0.0
  %1637 = vmatpush2.msra.mxu0 0.0
  %1638 = vmatprep.subr.mxu0 0.0
  %1639 = vmatpush2.msra.mxu0 0.0
  %1640 = vmatprep.subr.mxu0 0.0
  %1641 = vmatpush2.msra.mxu0 0.0
  %1642 = vmatprep.subr.mxu0 0.0
  %1643 = vmatpush2.msra.mxu0 0.0
  %1644 = vmatprep.subr.mxu0 0.0
  %1645 = vmatpush2.msra.mxu0 0.0
  %1646 = vmatprep.mubr.f32.mxu0 0.0
  %1647 = vmatmul.mubr.f32.gmra.mxu0 %v1580
  %v1648 = vpop.f32.mrf.mxu0
  %v1649 = vadd.f32 0.0, %v1648
  %v1650 = vpop.f32.mrf.mxu0
  %1651 = vdwg.mxu0
  %v1652 = vsel %vm96, %v1573, 0
  %1654 = vmatprep.subr.mxu0 0.0
  %1655 = vmatpush1.msra.mxu0 0.0
  %1656 = vmatprep.subr.mxu0 0.0
  %1657 = vmatpush1.msra.mxu0 0.0
  %1658 = vmatprep.subr.mxu0 0.0
  %1659 = vmatpush1.msra.mxu0 0.0
  %1660 = vmatprep.subr.mxu0 0.0
  %1661 = vmatpush1.msra.mxu0 0.0
  %1662 = vmatprep.subr.mxu0 0.0
  %1663 = vmatpush1.msra.mxu0 0.0
  %1664 = vmatprep.subr.mxu0 0.0
  %1665 = vmatpush1.msra.mxu0 0.0
  %1666 = vmatprep.subr.mxu0 0.0
  %1667 = vmatpush1.msra.mxu0 0.0
  %1668 = vmatprep.subr.mxu0 0.0
  %1669 = vmatpush1.msra.mxu0 0.0
  %1670 = vmatprep.subr.mxu0 0.0
  %1671 = vmatpush1.msra.mxu0 0.0
  %1672 = vmatprep.subr.mxu0 0.0
  %1673 = vmatpush1.msra.mxu0 0.0
  %1674 = vmatprep.subr.mxu0 0.0
  %1675 = vmatpush1.msra.mxu0 0.0
  %1676 = vmatprep.subr.mxu0 0.0
  %1677 = vmatpush1.msra.mxu0 0.0
  %1678 = vmatprep.subr.mxu0 0.0
  %1679 = vmatpush1.msra.mxu0 %v78
  %1680 = vmatprep.subr.mxu0 0.0
  %1681 = vmatpush1.msra.mxu0 %v77
  %1682 = vmatprep.subr.mxu0 0.0
  %1683 = vmatpush1.msra.mxu0 %v76
  %1684 = vmatprep.subr.mxu0 0.0
  %1685 = vmatpush1.msra.mxu0 %v75
  %1686 = vmatprep.subr.mxu0 0.0
  %1687 = vmatpush2.msra.mxu0 0.0
  %1688 = vmatprep.subr.mxu0 0.0
  %1689 = vmatpush2.msra.mxu0 0.0
  %1690 = vmatprep.subr.mxu0 0.0
  %1691 = vmatpush2.msra.mxu0 0.0
  %1692 = vmatprep.subr.mxu0 0.0
  %1693 = vmatpush2.msra.mxu0 0.0
  %1694 = vmatprep.subr.mxu0 0.0
  %1695 = vmatpush2.msra.mxu0 0.0
  %1696 = vmatprep.subr.mxu0 0.0
  %1697 = vmatpush2.msra.mxu0 0.0
  %1698 = vmatprep.subr.mxu0 0.0
  %1699 = vmatpush2.msra.mxu0 0.0
  %1700 = vmatprep.subr.mxu0 0.0
  %1701 = vmatpush2.msra.mxu0 0.0
  %1702 = vmatprep.subr.mxu0 0.0
  %1703 = vmatpush2.msra.mxu0 0.0
  %1704 = vmatprep.subr.mxu0 0.0
  %1705 = vmatpush2.msra.mxu0 0.0
  %1706 = vmatprep.subr.mxu0 0.0
  %1707 = vmatpush2.msra.mxu0 0.0
  %1708 = vmatprep.subr.mxu0 0.0
  %1709 = vmatpush2.msra.mxu0 0.0
  %1710 = vmatprep.subr.mxu0 0.0
  %1711 = vmatpush2.msra.mxu0 0.0
  %1712 = vmatprep.subr.mxu0 0.0
  %1713 = vmatpush2.msra.mxu0 0.0
  %1714 = vmatprep.subr.mxu0 0.0
  %1715 = vmatpush2.msra.mxu0 0.0
  %1716 = vmatprep.subr.mxu0 0.0
  %1717 = vmatpush2.msra.mxu0 0.0
  %1718 = vmatprep.mubr.f32.mxu0 0.0
  %1719 = vmatmul.mubr.f32.gmra.mxu0 %v1652
  %v1720 = vpop.f32.mrf.mxu0
  %v1721 = vadd.f32 0.0, %v1720
  %v1722 = vpop.f32.mrf.mxu0
  %1723 = vdwg.mxu0
  %v1724 = vadd.f32 %v1578, %v1649
  %v1725 = vmul.f32 %v1724, 0.5
  %v1726 = vtanh.pop %v1725
  %v1727 = vadd.f32 %v1726, 1.0
  %v1728 = vmul.f32 %v1727, 0.5
  %v1729 = vadd.f32 %v1649, %v249
  %1731 = vrot.lane.b32.xlu0 %v1729, 64
  %v1732 = vpop.permute.xlu0 %1731
  %v1734 = vmul.f32 %v1728, %v1732
  %1736 = vrot.lane.b32.xlu0 %v1734, 64
  %v1737 = vpop.permute.xlu0 %1736
  %v1739 = vadd.f32 %v1578, %v1737
  %v1740 = vtanh.pop %v1739
  %v1741 = vsub.f32 1.0, %v1728
  %1743 = vrot.lane.b32.xlu0 %v1740, 96
  %v1744 = vpop.permute.xlu0 %1743
  %v1746 = vmul.f32 %v1741, %v1744
  %v1747 = vmul.f32 %v1728, %v1539
  %v1748 = vadd.f32 %v1746, %v1747
  %v1749 = vadd.f32 %v1579, %v1721
  %v1750 = vmul.f32 %v1749, 0.5
  %v1751 = vtanh.pop %v1750
  %v1752 = vadd.f32 %v1751, 1.0
  %v1753 = vmul.f32 %v1752, 0.5
  %v1754 = vadd.f32 %v1721, %v280
  %1756 = vrot.lane.b32.xlu0 %v1754, 64
  %v1757 = vpop.permute.xlu0 %1756
  %v1759 = vmul.f32 %v1753, %v1757
  %1761 = vrot.lane.b32.xlu0 %v1759, 64
  %v1762 = vpop.permute.xlu0 %1761
  %v1764 = vadd.f32 %v1579, %v1762
  %v1765 = vtanh.pop %v1764
  %v1766 = vsub.f32 1.0, %v1753
  %1768 = vrot.lane.b32.xlu0 %v1765, 96
  %v1769 = vpop.permute.xlu0 %1768
  %v1771 = vmul.f32 %v1766, %v1769
  %v1772 = vmul.f32 %v1753, %v1564
  %v1773 = vadd.f32 %v1771, %v1772
  %1775 = vrot.lane.b32.xlu0 %v1748, 96
  %v1776 = vpop.permute.xlu0 %1775
  %s1778 = scalar_lea.vmem %s6, 14
  %1779 = vst.msk [vmem:[%s1778] sm:$0x3] %vm309, %v1776
  %1781 = vrot.lane.b32.xlu0 %v1773, 96
  %v1782 = vpop.permute.xlu0 %1781
  %1784 = vst.msk [vmem:[%s61] sm:$0x3] %vm309, %v1782
  %1785 = vst.msk [vmem:[#allocation2] sm:$0x3] %vm309, %v1776
  %1786 = vst.msk [vmem:[#allocation3] sm:$0x3] %vm309, %v1782
  %s1787 = ssub.s32 0, 0
  %s1788 = smul.u32 8, %s1787
  %p1789 = scmp.lt.s32.totalorder %s1788, 7
  %s1790 = scalar_select %p1789, %s1788, 7
  %s1791 = smul.addr %s1790, 2
  %s1792 = scalar_lea.vmem %s7, %s1791
  // Predicated region
  $region30: #{encoder_forward.1} parent=0 // pred_check
    _
  $region31: #{encoder_forward.1} parent=0 // pred_check_branch
    %1794 = sbr.rel (0) target = $region33
  $region32: #{encoder_forward.1} parent=0 // pred_region
    _
  $region33: #{encoder_forward.1} parent=0 // pred_fallthru
    _
  // Predicated region
  $region34: #{encoder_forward.1} parent=0 // pred_check
    _
  $region35: #{encoder_forward.1} parent=0 // pred_check_branch
    %1796 = sbr.rel (0) target = $region37
  $region36: #{encoder_forward.1} parent=0 // pred_region
    %s1797 = ssub.s32 0, 0
    %s1798 = smul.u32 8, %s1797
  $region37: #{encoder_forward.1} parent=0 // pred_fallthru
    _
  // Predicated region
  $region38: #{encoder_forward.1} parent=0 // pred_check
    _
  $region39: #{encoder_forward.1} parent=0 // pred_check_branch
    %1800 = sbr.rel (0) target = $region41
  $region40: #{encoder_forward.1} parent=0 // pred_region
    _
  $region41: #{encoder_forward.1} parent=0 // pred_fallthru
    _
  // Predicated region
  $region42: #{encoder_forward.1} parent=0 // pred_check
    _
  $region43: #{encoder_forward.1} parent=0 // pred_check_branch
    %1802 = sbr.rel (0) target = $region45
  $region44: #{encoder_forward.1} parent=0 // pred_region
    %s1803 = ssub.s32 0, 0
    %s1804 = smul.u32 8, %s1803
    %p1805 = scmp.lt.s32.totalorder %s1804, 7
    %s1806 = scalar_select %p1805, %s1804, 7
    %s1807 = smul.addr %s1806, 2
    %s1808 = scalar_lea.vmem %s7, %s1807
  $region45: #{encoder_forward.1} parent=0 // pred_fallthru
    _

</llo_original>
